<compile_context>
chip_gen: v6e
topology: v6e:2x2x1
jax: 0.10.0
libtpu: 0.0.40
codegen_flags: <defaults>
</compile_context>

<pallas_src>
import functools
import itertools

import numpy as np
import jax
import jax.numpy as jnp
from jax import lax
from jax.experimental import pallas as pl
from jax.experimental.pallas import tpu as pltpu


# ----------------------------- Pallas kernel -------------------------------

def _cost_kernel(logits_ref, onehot_ref, om_ref, tm_ref, c_ref,
                 acc_ce_ref, acc_dice_ref, acc_sp_ref, acc_sig_ref, acc_tm_ref,
                 *, num_points, w_class, w_mask, w_dice, mxu_dtype):
    """Grid = (B, P_tiles).  Outer axis: one batch element per step ("parallel").
    Inner axis: reduction over sampled points ("arbitrary", accumulators in VMEM)."""
    p = pl.program_id(1)

    @pl.when(p == 0)
    def _init():
        acc_ce_ref[...] = jnp.zeros_like(acc_ce_ref)
        acc_dice_ref[...] = jnp.zeros_like(acc_dice_ref)
        acc_sp_ref[...] = jnp.zeros_like(acc_sp_ref)
        acc_sig_ref[...] = jnp.zeros_like(acc_sig_ref)
        acc_tm_ref[...] = jnp.zeros_like(acc_tm_ref)

    om = om_ref[0].astype(jnp.float32)     # [Q, Pt]  mask logits at sampled points
    tm = tm_ref[0].astype(jnp.float32)     # [Tp, Pt] target masks at sampled points

    # Elementwise pieces (EUP), kept in f32 (v5e VPU/EUP has no bf16):
    #   sigmoid via tanh (one EUP op, no inf), stable softplus.
    sig = 0.5 * (jnp.tanh(0.5 * om) + 1.0)
    # log(1+exp(-|x|)): absolute error vs log1p < ~6e-8 per element, i.e. <1e-7
    # in the final cost after the /P normalization -- far below tolerance.
    sp = jnp.maximum(om, 0.0) + jnp.log(1.0 + jnp.exp(-jnp.abs(om)))

    acc_sp_ref[...] += jnp.sum(sp, axis=-1, keepdims=True)     # [Q, 1]
    acc_sig_ref[...] += jnp.sum(sig, axis=-1, keepdims=True)   # [Q, 1]
    acc_tm_ref[...] += jnp.sum(tm, axis=-1)[None, :]           # [1, Tp]

    # Two P-contractions on the MXU (A @ B^T), f32 partial-sum accumulators.
    # Fused sigmoid-CE identity:
    #   dot(softplus(-x), t) + dot(softplus(x), 1-t) == rowsum(softplus(x)) - dot(x, t)
    # so only dot(om, tm) and dot(sigmoid(om), tm) are needed; the negation is
    # applied to the small [Q, Tp] result at finalize, not the [Q, P] input.
    dn = (((1,), (1,)), ((), ()))
    tm_mxu = tm.astype(mxu_dtype)
    acc_ce_ref[...] += lax.dot_general(om.astype(mxu_dtype), tm_mxu, dn,
                                       preferred_element_type=jnp.float32)
    acc_dice_ref[...] += lax.dot_general(sig.astype(mxu_dtype), tm_mxu, dn,
                                         preferred_element_type=jnp.float32)

    @pl.when(p == pl.num_programs(1) - 1)
    def _finalize():
        # cost_class = -softmax(logits)[:, tgt_ids]  (gather as one-hot matmul).
        # Single per-row reciprocal instead of an O(Q*C) elementwise divide.
        logits = logits_ref[0].astype(jnp.float32)              # [Q, C]
        onehot = onehot_ref[0].astype(jnp.float32)               # [C, Tp]
        m = jnp.max(logits, axis=-1, keepdims=True)
        e = jnp.exp(logits - m)
        s = jnp.sum(e, axis=-1, keepdims=True)                    # [Q, 1]
        unnorm = jnp.dot(e, onehot, preferred_element_type=jnp.float32)   # [Q, Tp]
        cost_class = -(unnorm * pl.reciprocal(s, approx=False))

        # batch_sigmoid_ce_loss (fused identity above)
        inv_p = 1.0 / float(num_points)
        cost_mask = (acc_sp_ref[...] - acc_ce_ref[...]) * inv_p   # [Q, Tp]

        # batch_dice_loss
        numer = 2.0 * acc_dice_ref[...] + 1.0
        denom = acc_sig_ref[...] + acc_tm_ref[...] + 1.0
        cost_dice = 1.0 - numer / denom

        c = w_mask * cost_mask + w_class * cost_class + w_dice * cost_dice
        c_ref[0] = c.astype(c_ref.dtype)


def _pick_p_tile(num_points, max_tile):
    """Largest lane-aligned (multiple of 128) divisor of num_points <= max_tile.
    Falls back to a single full-P block if no aligned divisor exists (the block
    then equals the full array dim, so the (8,128) rule is still satisfied)."""
    if num_points <= max_tile:
        return num_points
    for cand in range(max_tile - max_tile % 128, 127, -128):
        if num_points % cand == 0:
            return cand
    return num_points


def compute_cost_matrices(pred_logits, tgt_onehot, out_mask_pts, tgt_mask_pts, *,
                          cost_class=1.0, cost_mask=1.0, cost_dice=1.0,
                          mxu_dtype=jnp.float32, max_p_tile=1024):
    """pred_logits [B,Q,C], tgt_onehot [B,C,T], out_mask_pts [B,Q,P],
    tgt_mask_pts [B,T,P] -> matching cost matrices [B,Q,T] (float32)."""
    B, Q, C = pred_logits.shape
    T = tgt_onehot.shape[-1]
    P = out_mask_pts.shape[-1]

    # Lane-dense output: pad targets to a multiple of 128.  Padded one-hot
    # columns / tm rows are zero; the padded cost columns are sliced off below
    # (keep that slice coupled to this padding scheme).
    Tp = max(128, ((T + 127) // 128) * 128)
    if Tp != T:
        tgt_onehot = jnp.pad(tgt_onehot, ((0, 0), (0, 0), (0, Tp - T)))
        tgt_mask_pts = jnp.pad(tgt_mask_pts, ((0, 0), (0, Tp - T), (0, 0)))

    # P (sampled points) is the reduction grid axis: production shapes
    # (P = 112*112 = 12544) stream through bounded double-buffered VMEM tiles.
    # max_p_tile=1024 keeps (Q+Tp)*Pt*4B*2buffers well inside v7x's 64 MiB VMEM.
    Pt = _pick_p_tile(P, max_p_tile)
    n_p = P // Pt

    kernel = functools.partial(
        _cost_kernel, num_points=P,
        w_class=float(cost_class), w_mask=float(cost_mask), w_dice=float(cost_dice),
        mxu_dtype=mxu_dtype)

    itemsize = out_mask_pts.dtype.itemsize
    cost_est = pl.CostEstimate(
        flops=int(2 * B * Q * Tp * P * 2 + 2 * B * Q * C * Tp),
        transcendentals=int(3 * B * Q * P + B * Q * C),
        bytes_accessed=int(pred_logits.size * pred_logits.dtype.itemsize
                           + tgt_onehot.size * tgt_onehot.dtype.itemsize
                           + out_mask_pts.size * itemsize
                           + tgt_mask_pts.size * tgt_mask_pts.dtype.itemsize
                           + B * Q * Tp * 4))

    # Explicit VMEM budget: double-buffered input tiles + output + accumulators
    # with headroom, capped at 64 MiB so the same number is valid on v7x.
    block_bytes = (Q * C + C * Tp + Q * Tp) * 4 + (Q + Tp) * Pt * itemsize
    scratch_bytes = (2 * Q * Tp + 2 * Q * 128 + 8 * Tp) * 4
    vmem_limit = int(min(64 * 1024 * 1024,
                         max(32 * 1024 * 1024,
                             3 * block_bytes + scratch_bytes + (1 << 20))))

    cost_p = pl.pallas_call(
        kernel,
        out_shape=jax.ShapeDtypeStruct((B, Q, Tp), jnp.float32),
        grid_spec=pltpu.PrefetchScalarGridSpec(
            num_scalar_prefetch=0,
            grid=(B, n_p),
            in_specs=[
                pl.BlockSpec((1, Q, C), lambda b, p: (b, 0, 0)),    # fetched once per b
                pl.BlockSpec((1, C, Tp), lambda b, p: (b, 0, 0)),   # fetched once per b
                pl.BlockSpec((1, Q, Pt), lambda b, p: (b, 0, p)),   # streamed over P
                pl.BlockSpec((1, Tp, Pt), lambda b, p: (b, 0, p)),  # streamed over P
            ],
            out_specs=pl.BlockSpec((1, Q, Tp), lambda b, p: (b, 0, 0)),
            scratch_shapes=[
                pltpu.VMEM((Q, Tp), jnp.float32),   # dot(om, tm^T) partial sums
                pltpu.VMEM((Q, Tp), jnp.float32),   # dot(sig, tm^T) partial sums
                pltpu.VMEM((Q, 1), jnp.float32),    # rowsum(softplus(om))
                pltpu.VMEM((Q, 1), jnp.float32),    # rowsum(sigmoid(om))
                pltpu.VMEM((1, Tp), jnp.float32),   # rowsum(tm)
            ],
        ),
        compiler_params=pltpu.CompilerParams(
            dimension_semantics=("parallel", "arbitrary"),
            vmem_limit_bytes=vmem_limit),
        cost_estimate=cost_est,
    )(pred_logits, tgt_onehot, out_mask_pts, tgt_mask_pts)

    return cost_p[:, :, :T]


# ------------------------------- JAX glue -----------------------------------

def point_sample(masks, coords):
    """Bilinear point sampling matching detectron2 point_sample / F.grid_sample
    (align_corners=False, padding_mode='zeros').
    masks  : [N, H, W] float
    coords : [P, 2] in [0,1], (x, y) order
    returns: [N, P]"""
    H, W = masks.shape[-2:]
    x = coords[:, 0] * W - 0.5
    y = coords[:, 1] * H - 0.5
    x0 = jnp.floor(x)
    y0 = jnp.floor(y)
    x1 = x0 + 1.0
    y1 = y0 + 1.0
    wx1 = x - x0
    wx0 = 1.0 - wx1
    wy1 = y - y0
    wy0 = 1.0 - wy1

    def gather(yi, xi):
        valid = ((xi >= 0) & (xi < W) & (yi >= 0) & (yi < H)).astype(masks.dtype)
        xc = jnp.clip(xi, 0, W - 1).astype(jnp.int32)
        yc = jnp.clip(yi, 0, H - 1).astype(jnp.int32)
        return masks[:, yc, xc] * valid[None, :]

    return (gather(y0, x0) * (wy0 * wx0)[None, :]
            + gather(y0, x1) * (wy0 * wx1)[None, :]
            + gather(y1, x0) * (wy1 * wx0)[None, :]
            + gather(y1, x1) * (wy1 * wx1)[None, :])


def hungarian_bruteforce(cost):
    """Host-side linear_sum_assignment replacement (exact brute force over
    permutations; fine for the small synthetic sizes used here)."""
    # TODO(synk): replace with scipy.optimize.linear_sum_assignment for real Q/T
    # (stays on host either way, as in the original .cpu() + scipy path).
    cost = np.asarray(cost)
    Q, T = cost.shape
    best, best_perm = None, None
    for perm in itertools.permutations(range(Q), T):
        s = sum(cost[perm[j], j] for j in range(T))
        if best is None or s < best:
            best, best_perm = s, perm
    pairs = sorted(zip(best_perm, range(T)))
    rows = np.array([p[0] for p in pairs], dtype=np.int64)
    cols = np.array([p[1] for p in pairs], dtype=np.int64)
    return rows, cols


class HungarianMatcher:
    def __init__(self, cost_class=1.0, cost_mask=1.0, cost_dice=1.0, num_points=128,
                 mxu_dtype=jnp.float32, validate=False):
        assert cost_class != 0 or cost_mask != 0 or cost_dice != 0, "all costs cant be 0"
        self.cost_class = cost_class
        self.cost_mask = cost_mask
        self.cost_dice = cost_dice
        self.num_points = num_points
        # TODO(synk): set mxu_dtype=jnp.bfloat16 on v6e/v7x (halves HBM bytes on the
        # mem-bound path; f32 tile-wise accumulation stays) after re-validating
        # tolerance at production P=112*112.
        self.mxu_dtype = mxu_dtype
        self.validate = validate   # debug-only pure-JAX reference check

    def forward(self, outputs, targets, key):
        pred_logits = outputs["pred_logits"].astype(jnp.float32)   # [B, Q, C]
        pred_masks = outputs["pred_masks"].astype(jnp.float32)     # [B, Q, Hp, Wp]
        B, Q, C = pred_logits.shape
        P = self.num_points

        # Batched preprocessing: vmap over B instead of a per-batch Python loop.
        tgt_masks = jnp.stack([t["masks"] for t in targets]).astype(jnp.float32)  # [B,T,Hg,Wg]
        tgt_labels = jnp.stack([t["labels"] for t in targets])                    # [B,T]
        keys = jax.random.split(key, B)
        coords = jax.vmap(
            lambda k: jax.random.uniform(k, (P, 2), dtype=jnp.float32))(keys)     # [B,P,2]
        om = jax.vmap(point_sample)(pred_masks, coords)                           # [B,Q,P]
        tm = jax.vmap(point_sample)(tgt_masks, coords)                            # [B,T,P]
        onehot = jnp.swapaxes(
            jax.nn.one_hot(tgt_labels, C, dtype=jnp.float32), 1, 2)               # [B,C,T]

        cost = compute_cost_matrices(pred_logits, onehot, om, tm,
                                     cost_class=self.cost_class,
                                     cost_mask=self.cost_mask,
                                     cost_dice=self.cost_dice,
                                     mxu_dtype=self.mxu_dtype)
        cost = jax.block_until_ready(cost)

        if self.validate:
            # Pure-JAX, unfused reference (debug only; dominates wall clock at
            # production sizes, hence gated).
            probs = jax.nn.softmax(pred_logits, axis=-1)
            cc = -jnp.einsum("bqc,bct->bqt", probs, onehot)
            pos = jax.nn.softplus(-om)
            neg = jax.nn.softplus(om)
            cm = (jnp.einsum("bqp,btp->bqt", pos, tm)
                  + jnp.einsum("bqp,btp->bqt", neg, 1.0 - tm)) / P
            sig = jax.nn.sigmoid(om)
            numer = 2.0 * jnp.einsum("bqp,btp->bqt", sig, tm)
            denom = sig.sum(-1)[..., :, None] + tm.sum(-1)[..., None, :]
            cd = 1.0 - (numer + 1.0) / (denom + 1.0)
            ref = self.cost_mask * cm + self.cost_class * cc + self.cost_dice * cd
            np.testing.assert_allclose(np.asarray(cost), np.asarray(ref),
                                       rtol=5e-4, atol=5e-4)

        indices = []
        for b in range(B):
            i, j = hungarian_bruteforce(np.asarray(cost[b]))
            indices.append((i, j))
        return indices, cost


# --------------------------------- main --------------------------------------

if __name__ == "__main__":
    key = jax.random.PRNGKey(0)
    B, Q, C = 2, 8, 16          # batch, num_queries, num_classes(+1)
    Hp = Wp = 16                # pred mask resolution
    Hg = Wg = 32                # GT mask resolution
    T = 4                       # targets per image (fixed for the synthetic case)
    P = 128                     # num_points

    k1, k2, k3, k4 = jax.random.split(key, 4)
    outputs = {
        "pred_logits": jax.random.normal(k1, (B, Q, C), dtype=jnp.float32),
        "pred_masks": jax.random.normal(k2, (B, Q, Hp, Wp), dtype=jnp.float32),
    }
    labels = jax.random.randint(k3, (B, T), 0, C)
    masks = (jax.random.uniform(k4, (B, T, Hg, Wg)) > 0.5).astype(jnp.float32)
    targets = [{"labels": labels[b], "masks": masks[b]} for b in range(B)]

    matcher = HungarianMatcher(cost_class=1.0, cost_mask=1.0, cost_dice=1.0,
                               num_points=P, validate=True)
    indices, cost = matcher.forward(outputs, targets, jax.random.PRNGKey(42))
    jax.block_until_ready(cost)
    for i, j in indices:
        assert len(i) == len(j) == min(Q, T)
    print("KERNEL_OK")
</pallas_src>

<mosaic_0001>
module attributes {stable_mosaic.version = 11 : i64} {
  func.func @_cost_kernel(%arg0: i32, %arg1: i32, %arg2: memref<1x8x16xf32, #tpu.memory_space<vmem>>, %arg3: memref<1x16x128xf32, #tpu.memory_space<vmem>>, %arg4: memref<1x8x128xf32, #tpu.memory_space<vmem>>, %arg5: memref<1x128x128xf32, #tpu.memory_space<vmem>>, %arg6: memref<1x8x128xf32, #tpu.memory_space<vmem>>, %arg7: memref<8x128xf32, #tpu.memory_space<vmem>>, %arg8: memref<8x128xf32, #tpu.memory_space<vmem>>, %arg9: memref<8x1xf32, #tpu.memory_space<vmem>>, %arg10: memref<8x1xf32, #tpu.memory_space<vmem>>, %arg11: memref<1x128xf32, #tpu.memory_space<vmem>>) attributes {dimension_semantics = [#tpu.dimension_semantics<parallel>, #tpu.dimension_semantics<arbitrary>], iteration_bounds = array<i64: 2, 1>, scalar_prefetch = 0 : i64, scratch_operands = 5 : i64, tpu.core_type = #tpu.core_type<tc>, window_params = [{transform_indices = @transform_0, window_bounds = array<i64: 1, 8, 16>}, {transform_indices = @transform_1, window_bounds = array<i64: 1, 16, 128>}, {transform_indices = @transform_2, window_bounds = array<i64: 1, 8, 128>}, {transform_indices = @transform_3, window_bounds = array<i64: 1, 128, 128>}, {transform_indices = @transform_4, window_bounds = array<i64: 1, 8, 128>}]} {
    %c0_i32 = arith.constant 0 : i32
    %0 = arith.cmpi eq, %arg1, %c0_i32 : i32
    %1 = arith.extui %0 : i1 to i32
    %c0_i32_0 = arith.constant 0 : i32
    %2 = arith.cmpi ne, %1, %c0_i32_0 : i32
    scf.if %2 {
      %cst_38 = arith.constant 0.000000e+00 : f32
      %50 = vector.broadcast %cst_38 : f32 to vector<8x128xf32>
      %c0_39 = arith.constant 0 : index
      %c0_40 = arith.constant 0 : index
      %51 = vector.load %arg7[%c0_39, %c0_40] : memref<8x128xf32, #tpu.memory_space<vmem>>, vector<8x128xf32>
      tpu.vector_store %arg7[%c0_39, %c0_40], %50 {strides = array<i32>} : memref<8x128xf32, #tpu.memory_space<vmem>>, vector<8x128xf32>,
      %cst_41 = arith.constant 0.000000e+00 : f32
      %52 = vector.broadcast %cst_41 : f32 to vector<8x128xf32>
      %c0_42 = arith.constant 0 : index
      %c0_43 = arith.constant 0 : index
      %53 = vector.load %arg8[%c0_42, %c0_43] : memref<8x128xf32, #tpu.memory_space<vmem>>, vector<8x128xf32>
      tpu.vector_store %arg8[%c0_42, %c0_43], %52 {strides = array<i32>} : memref<8x128xf32, #tpu.memory_space<vmem>>, vector<8x128xf32>,
      %cst_44 = arith.constant 0.000000e+00 : f32
      %54 = vector.broadcast %cst_44 : f32 to vector<8x1xf32>
      %c0_45 = arith.constant 0 : index
      %c0_46 = arith.constant 0 : index
      %55 = vector.load %arg9[%c0_45, %c0_46] : memref<8x1xf32, #tpu.memory_space<vmem>>, vector<8x1xf32>
      tpu.vector_store %arg9[%c0_45, %c0_46], %54 {strides = array<i32>} : memref<8x1xf32, #tpu.memory_space<vmem>>, vector<8x1xf32>,
      %cst_47 = arith.constant 0.000000e+00 : f32
      %56 = vector.broadcast %cst_47 : f32 to vector<8x1xf32>
      %c0_48 = arith.constant 0 : index
      %c0_49 = arith.constant 0 : index
      %57 = vector.load %arg10[%c0_48, %c0_49] : memref<8x1xf32, #tpu.memory_space<vmem>>, vector<8x1xf32>
      tpu.vector_store %arg10[%c0_48, %c0_49], %56 {strides = array<i32>} : memref<8x1xf32, #tpu.memory_space<vmem>>, vector<8x1xf32>,
      %cst_50 = arith.constant 0.000000e+00 : f32
      %58 = vector.broadcast %cst_50 : f32 to vector<1x128xf32>
      %c0_51 = arith.constant 0 : index
      %c0_52 = arith.constant 0 : index
      %59 = vector.load %arg11[%c0_51, %c0_52] : memref<1x128xf32, #tpu.memory_space<vmem>>, vector<1x128xf32>
      tpu.vector_store %arg11[%c0_51, %c0_52], %58 {strides = array<i32>} : memref<1x128xf32, #tpu.memory_space<vmem>>, vector<1x128xf32>,
    } else {
    }
    %c0 = arith.constant 0 : index
    %c0_1 = arith.constant 0 : index
    %c0_2 = arith.constant 0 : index
    %3 = vector.load %arg4[%c0, %c0_1, %c0_2] : memref<1x8x128xf32, #tpu.memory_space<vmem>>, vector<1x8x128xf32>
    %4 = vector.shape_cast %3 : vector<1x8x128xf32> to vector<8x128xf32>
    %c0_3 = arith.constant 0 : index
    %c0_4 = arith.constant 0 : index
    %c0_5 = arith.constant 0 : index
    %5 = vector.load %arg5[%c0_3, %c0_4, %c0_5] : memref<1x128x128xf32, #tpu.memory_space<vmem>>, vector<1x128x128xf32>
    %6 = vector.shape_cast %5 : vector<1x128x128xf32> to vector<128x128xf32>
    %cst = arith.constant 5.000000e-01 : f32
    %7 = vector.broadcast %cst : f32 to vector<8x128xf32>
    %8 = arith.mulf %7, %4 : vector<8x128xf32>
    %9 = math.tanh %8 : vector<8x128xf32>
    %cst_6 = arith.constant 1.000000e+00 : f32
    %10 = vector.broadcast %cst_6 : f32 to vector<8x128xf32>
    %11 = arith.addf %9, %10 : vector<8x128xf32>
    %cst_7 = arith.constant 5.000000e-01 : f32
    %12 = vector.broadcast %cst_7 : f32 to vector<8x128xf32>
    %13 = arith.mulf %12, %11 : vector<8x128xf32>
    %cst_8 = arith.constant 0.000000e+00 : f32
    %14 = vector.broadcast %cst_8 : f32 to vector<8x128xf32>
    %15 = arith.maximumf %4, %14 : vector<8x128xf32>
    %16 = math.absf %4 : vector<8x128xf32>
    %cst_9 = arith.constant 0.000000e+00 : f32
    %17 = vector.broadcast %cst_9 : f32 to vector<8x128xf32>
    %18 = arith.subf %17, %16 : vector<8x128xf32>
    %19 = math.exp %18 : vector<8x128xf32>
    %cst_10 = arith.constant 1.000000e+00 : f32
    %20 = vector.broadcast %cst_10 : f32 to vector<8x128xf32>
    %21 = arith.addf %20, %19 : vector<8x128xf32>
    %22 = math.log %21 : vector<8x128xf32>
    %23 = arith.addf %15, %22 : vector<8x128xf32>
    %c0_11 = arith.constant 0 : index
    %c0_12 = arith.constant 0 : index
    %24 = vector.load %arg9[%c0_11, %c0_12] : memref<8x1xf32, #tpu.memory_space<vmem>>, vector<8x1xf32>
    %cst_13 = arith.constant dense<0.000000e+00> : vector<8xf32>
    %25 = vector.multi_reduction <add>, %23, %cst_13 [1] : vector<8x128xf32> to vector<8xf32>
    %26 = vector.shape_cast %25 : vector<8xf32> to vector<8x1xf32>
    %27 = arith.addf %24, %26 : vector<8x1xf32>
    %c0_14 = arith.constant 0 : index
    %c0_15 = arith.constant 0 : index
    %28 = vector.load %arg9[%c0_14, %c0_15] : memref<8x1xf32, #tpu.memory_space<vmem>>, vector<8x1xf32>
    tpu.vector_store %arg9[%c0_14, %c0_15], %27 {strides = array<i32>} : memref<8x1xf32, #tpu.memory_space<vmem>>, vector<8x1xf32>,
    %c0_16 = arith.constant 0 : index
    %c0_17 = arith.constant 0 : index
    %29 = vector.load %arg10[%c0_16, %c0_17] : memref<8x1xf32, #tpu.memory_space<vmem>>, vector<8x1xf32>
    %cst_18 = arith.constant dense<0.000000e+00> : vector<8xf32>
    %30 = vector.multi_reduction <add>, %13, %cst_18 [1] : vector<8x128xf32> to vector<8xf32>
    %31 = vector.shape_cast %30 : vector<8xf32> to vector<8x1xf32>
    %32 = arith.addf %29, %31 : vector<8x1xf32>
    %c0_19 = arith.constant 0 : index
    %c0_20 = arith.constant 0 : index
    %33 = vector.load %arg10[%c0_19, %c0_20] : memref<8x1xf32, #tpu.memory_space<vmem>>, vector<8x1xf32>
    tpu.vector_store %arg10[%c0_19, %c0_20], %32 {strides = array<i32>} : memref<8x1xf32, #tpu.memory_space<vmem>>, vector<8x1xf32>,
    %c0_21 = arith.constant 0 : index
    %c0_22 = arith.constant 0 : index
    %34 = vector.load %arg11[%c0_21, %c0_22] : memref<1x128xf32, #tpu.memory_space<vmem>>, vector<1x128xf32>
    %cst_23 = arith.constant dense<0.000000e+00> : vector<128xf32>
    %35 = vector.multi_reduction <add>, %6, %cst_23 [1] : vector<128x128xf32> to vector<128xf32>
    %36 = vector.shape_cast %35 : vector<128xf32> to vector<1x128xf32>
    %37 = arith.addf %34, %36 : vector<1x128xf32>
    %c0_24 = arith.constant 0 : index
    %c0_25 = arith.constant 0 : index
    %38 = vector.load %arg11[%c0_24, %c0_25] : memref<1x128xf32, #tpu.memory_space<vmem>>, vector<1x128xf32>
    tpu.vector_store %arg11[%c0_24, %c0_25], %37 {strides = array<i32>} : memref<1x128xf32, #tpu.memory_space<vmem>>, vector<1x128xf32>,
    %c0_26 = arith.constant 0 : index
    %c0_27 = arith.constant 0 : index
    %39 = vector.load %arg7[%c0_26, %c0_27] : memref<8x128xf32, #tpu.memory_space<vmem>>, vector<8x128xf32>
    %cst_28 = arith.constant dense<0.000000e+00> : vector<8x128xf32>
    %40 = tpu.matmul %4, %6, %cst_28 {dimension_numbers = #tpu.dot_dimension_numbers<[1], [1], [0], [0], [0, 0, 1, 0], [], []>} : vector<8x128xf32>, vector<128x128xf32>, vector<8x128xf32> -> vector<8x128xf32>
    %41 = arith.addf %39, %40 : vector<8x128xf32>
    %c0_29 = arith.constant 0 : index
    %c0_30 = arith.constant 0 : index
    %42 = vector.load %arg7[%c0_29, %c0_30] : memref<8x128xf32, #tpu.memory_space<vmem>>, vector<8x128xf32>
    tpu.vector_store %arg7[%c0_29, %c0_30], %41 {strides = array<i32>} : memref<8x128xf32, #tpu.memory_space<vmem>>, vector<8x128xf32>,
    %c0_31 = arith.constant 0 : index
    %c0_32 = arith.constant 0 : index
    %43 = vector.load %arg8[%c0_31, %c0_32] : memref<8x128xf32, #tpu.memory_space<vmem>>, vector<8x128xf32>
    %cst_33 = arith.constant dense<0.000000e+00> : vector<8x128xf32>
    %44 = tpu.matmul %13, %6, %cst_33 {dimension_numbers = #tpu.dot_dimension_numbers<[1], [1], [0], [0], [0, 0, 1, 0], [], []>} : vector<8x128xf32>, vector<128x128xf32>, vector<8x128xf32> -> vector<8x128xf32>
    %45 = arith.addf %43, %44 : vector<8x128xf32>
    %c0_34 = arith.constant 0 : index
    %c0_35 = arith.constant 0 : index
    %46 = vector.load %arg8[%c0_34, %c0_35] : memref<8x128xf32, #tpu.memory_space<vmem>>, vector<8x128xf32>
    tpu.vector_store %arg8[%c0_34, %c0_35], %45 {strides = array<i32>} : memref<8x128xf32, #tpu.memory_space<vmem>>, vector<8x128xf32>,
    %c0_i32_36 = arith.constant 0 : i32
    %47 = arith.cmpi eq, %arg1, %c0_i32_36 : i32
    %48 = arith.extui %47 : i1 to i32
    %c0_i32_37 = arith.constant 0 : i32
    %49 = arith.cmpi ne, %48, %c0_i32_37 : i32
    scf.if %49 {
      %c0_38 = arith.constant 0 : index
      %c0_39 = arith.constant 0 : index
      %c0_40 = arith.constant 0 : index
      %50 = vector.load %arg2[%c0_38, %c0_39, %c0_40] : memref<1x8x16xf32, #tpu.memory_space<vmem>>, vector<1x8x16xf32>
      %51 = vector.shape_cast %50 : vector<1x8x16xf32> to vector<8x16xf32>
      %c0_41 = arith.constant 0 : index
      %c0_42 = arith.constant 0 : index
      %c0_43 = arith.constant 0 : index
      %52 = vector.load %arg3[%c0_41, %c0_42, %c0_43] : memref<1x16x128xf32, #tpu.memory_space<vmem>>, vector<1x16x128xf32>
      %53 = vector.shape_cast %52 : vector<1x16x128xf32> to vector<16x128xf32>
      %cst_44 = arith.constant dense<0xFF800000> : vector<8xf32>
      %54 = vector.multi_reduction <maximumf>, %51, %cst_44 [1] : vector<8x16xf32> to vector<8xf32>
      %55 = vector.shape_cast %54 : vector<8xf32> to vector<8x1xf32>
      %56 = vector.broadcast %55 : vector<8x1xf32> to vector<8x16xf32>
      %57 = arith.subf %51, %56 : vector<8x16xf32>
      %58 = math.exp %57 : vector<8x16xf32>
      %cst_45 = arith.constant dense<0.000000e+00> : vector<8xf32>
      %59 = vector.multi_reduction <add>, %58, %cst_45 [1] : vector<8x16xf32> to vector<8xf32>
      %60 = vector.shape_cast %59 : vector<8xf32> to vector<8x1xf32>
      %cst_46 = arith.constant dense<0.000000e+00> : vector<8x128xf32>
      %61 = tpu.matmul %58, %53, %cst_46 {dimension_numbers = #tpu.dot_dimension_numbers<[1], [0], [0], [1], [0, 0, 1, 1], [], []>} : vector<8x16xf32>, vector<16x128xf32>, vector<8x128xf32> -> vector<8x128xf32>
      %62 = tpu.reciprocal %60 : vector<8x1xf32> -> vector<8x1xf32>
      %63 = vector.broadcast %62 : vector<8x1xf32> to vector<8x128xf32>
      %64 = arith.mulf %61, %63 : vector<8x128xf32>
      %cst_47 = arith.constant 0.000000e+00 : f32
      %65 = vector.broadcast %cst_47 : f32 to vector<8x128xf32>
      %66 = arith.subf %65, %64 : vector<8x128xf32>
      %c0_48 = arith.constant 0 : index
      %c0_49 = arith.constant 0 : index
      %67 = vector.load %arg9[%c0_48, %c0_49] : memref<8x1xf32, #tpu.memory_space<vmem>>, vector<8x1xf32>
      %c0_50 = arith.constant 0 : index
      %c0_51 = arith.constant 0 : index
      %68 = vector.load %arg7[%c0_50, %c0_51] : memref<8x128xf32, #tpu.memory_space<vmem>>, vector<8x128xf32>
      %69 = vector.broadcast %67 : vector<8x1xf32> to vector<8x128xf32>
      %70 = arith.subf %69, %68 : vector<8x128xf32>
      %cst_52 = arith.constant 7.812500e-03 : f32
      %71 = vector.broadcast %cst_52 : f32 to vector<8x128xf32>
      %72 = arith.mulf %70, %71 : vector<8x128xf32>
      %c0_53 = arith.constant 0 : index
      %c0_54 = arith.constant 0 : index
      %73 = vector.load %arg8[%c0_53, %c0_54] : memref<8x128xf32, #tpu.memory_space<vmem>>, vector<8x128xf32>
      %cst_55 = arith.constant 2.000000e+00 : f32
      %74 = vector.broadcast %cst_55 : f32 to vector<8x128xf32>
      %75 = arith.mulf %74, %73 : vector<8x128xf32>
      %cst_56 = arith.constant 1.000000e+00 : f32
      %76 = vector.broadcast %cst_56 : f32 to vector<8x128xf32>
      %77 = arith.addf %75, %76 : vector<8x128xf32>
      %c0_57 = arith.constant 0 : index
      %c0_58 = arith.constant 0 : index
      %78 = vector.load %arg10[%c0_57, %c0_58] : memref<8x1xf32, #tpu.memory_space<vmem>>, vector<8x1xf32>
      %c0_59 = arith.constant 0 : index
      %c0_60 = arith.constant 0 : index
      %79 = vector.load %arg11[%c0_59, %c0_60] : memref<1x128xf32, #tpu.memory_space<vmem>>, vector<1x128xf32>
      %80 = vector.broadcast %78 : vector<8x1xf32> to vector<8x128xf32>
      %81 = vector.broadcast %79 : vector<1x128xf32> to vector<8x128xf32>
      %82 = arith.addf %80, %81 : vector<8x128xf32>
      %cst_61 = arith.constant 1.000000e+00 : f32
      %83 = vector.broadcast %cst_61 : f32 to vector<8x128xf32>
      %84 = arith.addf %82, %83 : vector<8x128xf32>
      %85 = arith.divf %77, %84 : vector<8x128xf32>
      %cst_62 = arith.constant 1.000000e+00 : f32
      %86 = vector.broadcast %cst_62 : f32 to vector<8x128xf32>
      %87 = arith.subf %86, %85 : vector<8x128xf32>
      %cst_63 = arith.constant 1.000000e+00 : f32
      %88 = vector.broadcast %cst_63 : f32 to vector<8x128xf32>
      %89 = arith.mulf %88, %72 : vector<8x128xf32>
      %cst_64 = arith.constant 1.000000e+00 : f32
      %90 = vector.broadcast %cst_64 : f32 to vector<8x128xf32>
      %91 = arith.mulf %90, %66 : vector<8x128xf32>
      %92 = arith.addf %89, %91 : vector<8x128xf32>
      %cst_65 = arith.constant 1.000000e+00 : f32
      %93 = vector.broadcast %cst_65 : f32 to vector<8x128xf32>
      %94 = arith.mulf %93, %87 : vector<8x128xf32>
      %95 = arith.addf %92, %94 : vector<8x128xf32>
      %c0_66 = arith.constant 0 : index
      %c0_67 = arith.constant 0 : index
      %c0_68 = arith.constant 0 : index
      %96 = vector.load %arg6[%c0_66, %c0_67, %c0_68] : memref<1x8x128xf32, #tpu.memory_space<vmem>>, vector<1x8x128xf32>
      %97 = vector.shape_cast %96 : vector<1x8x128xf32> to vector<8x128xf32>
      %98 = vector.shape_cast %95 : vector<8x128xf32> to vector<1x8x128xf32>
      tpu.vector_store %arg6[%c0_66, %c0_67, %c0_68], %98 {strides = array<i32>} : memref<1x8x128xf32, #tpu.memory_space<vmem>>, vector<1x8x128xf32>,
    } else {
    }
    return
  }
  func.func @transform_0(%arg0: i32, %arg1: i32) -> (i32, i32, i32) {
    %c0_i32 = arith.constant 0 : i32
    %c0_i32_0 = arith.constant 0 : i32
    %c0_i32_1 = arith.constant 0 : i32
    return %arg0, %c0_i32, %c0_i32_0 : i32, i32, i32
  }
  func.func @transform_1(%arg0: i32, %arg1: i32) -> (i32, i32, i32) {
    %c0_i32 = arith.constant 0 : i32
    %c0_i32_0 = arith.constant 0 : i32
    %c0_i32_1 = arith.constant 0 : i32
    return %arg0, %c0_i32, %c0_i32_0 : i32, i32, i32
  }
  func.func @transform_2(%arg0: i32, %arg1: i32) -> (i32, i32, i32) {
    %c0_i32 = arith.constant 0 : i32
    %c0_i32_0 = arith.constant 0 : i32
    return %arg0, %c0_i32, %arg1 : i32, i32, i32
  }
  func.func @transform_3(%arg0: i32, %arg1: i32) -> (i32, i32, i32) {
    %c0_i32 = arith.constant 0 : i32
    %c0_i32_0 = arith.constant 0 : i32
    return %arg0, %c0_i32, %arg1 : i32, i32, i32
  }
  func.func @transform_4(%arg0: i32, %arg1: i32) -> (i32, i32, i32) {
    %c0_i32 = arith.constant 0 : i32
    %c0_i32_0 = arith.constant 0 : i32
    %c0_i32_1 = arith.constant 0 : i32
    return %arg0, %c0_i32, %c0_i32_0 : i32, i32, i32
  }
}

</mosaic_0001>

<llo_original>
// kernel: tpu_custom_call.1
$region0: #{tpu_custom_call.1}
  #allocation0 [shape = 'u32[]', space=smem, size = 0x4, offset = 0x4, fixed_abs, tag = 'smem constant byte address 0x4 - core index']
  #allocation1 [shape = 'u32[144,128]{1,0:T(1,128)}', space=vmem, size = 0x12000, scoped, tag = 'internal scratch']
  #allocation2 [shape = 'f32[8,128]{1,0:T(8,128)}', space=vmem, size = 0x1000, scoped, tag = 'scratch operand']
  #allocation3 [shape = 'f32[8,128]{1,0:T(8,128)}', space=vmem, size = 0x1000, scoped, tag = 'scratch operand']
  #allocation4 [shape = 'f32[8,1]{1,0:T(8,128)}', space=vmem, size = 0x1000, scoped, tag = 'scratch operand']
  #allocation5 [shape = 'f32[8,1]{1,0:T(8,128)}', space=vmem, size = 0x1000, scoped, tag = 'scratch operand']
  #allocation6 [shape = 'f32[1,128]{1,0:T(1,128)}', space=vmem, size = 0x200, scoped, tag = 'scratch operand']
  %s0 = inlined_call_operand.hbm [shape: f32[2,8,16], index: 0, kind: input, shape index: {}]
  %s1 = inlined_call_operand.hbm [shape: f32[2,16,128], index: 1, kind: input, shape index: {}]
  %s2 = inlined_call_operand.hbm [shape: f32[2,8,128], index: 2, kind: input, shape index: {}]
  %s3 = inlined_call_operand.hbm [shape: f32[2,128,128], index: 3, kind: input, shape index: {}]
  %s4 = inlined_call_operand.hbm [shape: f32[2,8,128], index: 4, kind: output, shape index: {}]
  %s5 = sld [smem:[#allocation0]]
  $region73: #{tpu_custom_call.1} parent=0
    _
  %s7 = ssub.s32 1, %s5
  %s8 = scalar_select 0, %s7, %s5
  $region1: #{tpu_custom_call.1} parent=0
    #allocation7 [shape = 'u8[8192]{0}', space=vmem, size = 0x2000, scoped, tag = 'input window, operand 0']
    #allocation8 [shape = 's32[2]{0}', space=sflag, size = 0x8, scoped, tag = 'scoped memory for tpu_custom_call.1']
    #allocation9 [shape = 's32[2]{0}', space=sflag, size = 0x8, scoped, tag = 'scoped memory for tpu_custom_call.1']
    #allocation10 [shape = 'u8[16384]{0}', space=vmem, size = 0x4000, scoped, tag = 'input window, operand 1']
    #allocation11 [shape = 's32[2]{0}', space=sflag, size = 0x8, scoped, tag = 'scoped memory for tpu_custom_call.1']
    #allocation12 [shape = 'u8[8192]{0}', space=vmem, size = 0x2000, scoped, tag = 'input window, operand 2']
    #allocation13 [shape = 'u8[131072]{0}', space=vmem, size = 0x20000, scoped, tag = 'input window, operand 3']
    #allocation14 [shape = 's32[2]{0}', space=sflag, size = 0x8, scoped, tag = 'scoped memory for tpu_custom_call.1']
    #allocation15 [shape = 'u8[8192]{0}', space=vmem, size = 0x2000, scoped, tag = 'output window, operand 0']
    %9 = vsyncpa [#allocation8], 0
    %s10 = scalar_lea.sflag [#allocation8], 1
    %11 = vsyncpa %s10, 0
    %12 = vsyncpa [#allocation11], 0
    %s13 = scalar_lea.sflag [#allocation11], 1
    %14 = vsyncpa %s13, 0
    %15 = vsyncpa [#allocation14], 0
    %s16 = scalar_lea.sflag [#allocation14], 1
    %17 = vsyncpa %s16, 0
    %18 = vsyncpa [#allocation9], 0
    %s19 = scalar_lea.sflag [#allocation9], 1
    %20 = vsyncpa %s19, 0
    loop: start=0, step=1, limit=4
    $region2: #{tpu_custom_call.1} parent=1 // loop_pre_header
      _
    $region3: #{tpu_custom_call.1} parent=1 // loop_header
      %s22 = sphi 0, %s26
      %p23 = scmp.ge.s32.totalorder %s22, 4
      %s29 = sphi 0, %s41
      %s30 = sphi 0, %s37
      %s31 = sphi 0, %s29
      %s32 = sphi 0, %s30
      %s33 = sphi 0, %s31
      %s34 = sphi 0, %s32
      %s44 = sphi 0, %s46
      %s47 = sphi 0, %s44
      %s48 = sphi 0, %s47
      %s64 = sphi 0, %s48
      %s70 = sphi 0, %s72
      %s73 = sphi 0, %s70
      %s74 = sphi 0, %s73
      %s90 = sphi 0, %s74
      %s98 = sphi 0, %s100
      %s101 = sphi 0, %s98
      %s102 = sphi 0, %s101
      %s118 = sphi 0, %s102
      %s126 = sphi 0, %s128
      %s129 = sphi 0, %s126
      %s130 = sphi 0, %s129
      %s146 = sphi 0, %s130
      %s152 = sphi 0, %s154
      %s155 = sphi 0, %s152
      %s156 = sphi 0, %s155
      %s172 = sphi 0, %s156
    $region4: #{tpu_custom_call.1} parent=1 // loop_header_branch
      %25 = sbr.rel (%p23) target = $region8
    $region5: #{tpu_custom_call.1} parent=1 // loop_body
      %s27 = ssub.s32 %s22, 1
      %s28 = ssub.s32 %s22, 2
      %s35 = sadd.s32 1, %s30
      %p36 = scmp.ge.s32.totalorder %s35, 1
      %s37 = scalar_select %p36, 0, %s35
      %s38 = sadd.s32 1, %s29
      %s39 = scalar_select %p36, %s38, %s29
      %p40 = scmp.ge.s32.totalorder %s39, 2
      %s41 = scalar_select %p40, 0, %s39
      %s42 = ssub.s32 %s29, %s41
      %p43 = scmp.eq.s32.totalorder %s42, 0
      %s45 = sadd.s32 %s44, 1
      %s46 = scalar_select %p43, %s44, %s45
      %p49 = pneg %p43
      %p50 = scmp.eq.s32.totalorder %s22, 1
      %p51 = por %p49, %p50
      %p52 = scmp.ne.s32.totalorder %s44, %s47
      %p53 = scmp.eq.s32.totalorder %s22, 0
      %p54 = por %p52, %p53
      %p55 = scmp.ne.s32.totalorder %s44, %s47
      %p56 = scmp.eq.s32.totalorder %s27, 1
      %p57 = por %p55, %p56
      %p58 = scmp.ne.s32.totalorder %s47, %s48
      %p59 = scmp.eq.s32.totalorder %s27, 0
      %p60 = por %p58, %p59
      %p61 = scmp.ne.s32.totalorder %s47, %s48
      %p62 = scmp.eq.s32.totalorder %s28, 1
      %p63 = por %p61, %p62
      %p65 = scmp.ne.s32.totalorder %s48, %s64
      %p66 = scmp.eq.s32.totalorder %s28, 0
      %p67 = por %p65, %p66
      %s68 = ssub.s32 %s29, %s41
      %p69 = scmp.eq.s32.totalorder %s68, 0
      %s71 = sadd.s32 %s70, 1
      %s72 = scalar_select %p69, %s70, %s71
      %p75 = pneg %p69
      %p76 = scmp.eq.s32.totalorder %s22, 1
      %p77 = por %p75, %p76
      %p78 = scmp.ne.s32.totalorder %s70, %s73
      %p79 = scmp.eq.s32.totalorder %s22, 0
      %p80 = por %p78, %p79
      %p81 = scmp.ne.s32.totalorder %s70, %s73
      %p82 = scmp.eq.s32.totalorder %s27, 1
      %p83 = por %p81, %p82
      %p84 = scmp.ne.s32.totalorder %s73, %s74
      %p85 = scmp.eq.s32.totalorder %s27, 0
      %p86 = por %p84, %p85
      %p87 = scmp.ne.s32.totalorder %s73, %s74
      %p88 = scmp.eq.s32.totalorder %s28, 1
      %p89 = por %p87, %p88
      %p91 = scmp.ne.s32.totalorder %s74, %s90
      %p92 = scmp.eq.s32.totalorder %s28, 0
      %p93 = por %p91, %p92
      %s94 = ssub.s32 %s29, %s41
      %s95 = ssub.s32 %s30, %s37
      %s96 = sor.u32 %s94, %s95
      %p97 = scmp.eq.s32.totalorder %s96, 0
      %s99 = sadd.s32 %s98, 1
      %s100 = scalar_select %p97, %s98, %s99
      %p103 = pneg %p97
      %p104 = scmp.eq.s32.totalorder %s22, 1
      %p105 = por %p103, %p104
      %p106 = scmp.ne.s32.totalorder %s98, %s101
      %p107 = scmp.eq.s32.totalorder %s22, 0
      %p108 = por %p106, %p107
      %p109 = scmp.ne.s32.totalorder %s98, %s101
      %p110 = scmp.eq.s32.totalorder %s27, 1
      %p111 = por %p109, %p110
      %p112 = scmp.ne.s32.totalorder %s101, %s102
      %p113 = scmp.eq.s32.totalorder %s27, 0
      %p114 = por %p112, %p113
      %p115 = scmp.ne.s32.totalorder %s101, %s102
      %p116 = scmp.eq.s32.totalorder %s28, 1
      %p117 = por %p115, %p116
      %p119 = scmp.ne.s32.totalorder %s102, %s118
      %p120 = scmp.eq.s32.totalorder %s28, 0
      %p121 = por %p119, %p120
      %s122 = ssub.s32 %s29, %s41
      %s123 = ssub.s32 %s30, %s37
      %s124 = sor.u32 %s122, %s123
      %p125 = scmp.eq.s32.totalorder %s124, 0
      %s127 = sadd.s32 %s126, 1
      %s128 = scalar_select %p125, %s126, %s127
      %p131 = pneg %p125
      %p132 = scmp.eq.s32.totalorder %s22, 1
      %p133 = por %p131, %p132
      %p134 = scmp.ne.s32.totalorder %s126, %s129
      %p135 = scmp.eq.s32.totalorder %s22, 0
      %p136 = por %p134, %p135
      %p137 = scmp.ne.s32.totalorder %s126, %s129
      %p138 = scmp.eq.s32.totalorder %s27, 1
      %p139 = por %p137, %p138
      %p140 = scmp.ne.s32.totalorder %s129, %s130
      %p141 = scmp.eq.s32.totalorder %s27, 0
      %p142 = por %p140, %p141
      %p143 = scmp.ne.s32.totalorder %s129, %s130
      %p144 = scmp.eq.s32.totalorder %s28, 1
      %p145 = por %p143, %p144
      %p147 = scmp.ne.s32.totalorder %s130, %s146
      %p148 = scmp.eq.s32.totalorder %s28, 0
      %p149 = por %p147, %p148
      %s150 = ssub.s32 %s29, %s41
      %p151 = scmp.eq.s32.totalorder %s150, 0
      %s153 = sadd.s32 %s152, 1
      %s154 = scalar_select %p151, %s152, %s153
      %p157 = pneg %p151
      %p158 = scmp.eq.s32.totalorder %s22, 1
      %p159 = por %p157, %p158
      %p160 = scmp.ne.s32.totalorder %s152, %s155
      %p161 = scmp.eq.s32.totalorder %s22, 0
      %p162 = por %p160, %p161
      %p163 = scmp.ne.s32.totalorder %s152, %s155
      %p164 = scmp.eq.s32.totalorder %s27, 1
      %p165 = por %p163, %p164
      %p166 = scmp.ne.s32.totalorder %s155, %s156
      %p167 = scmp.eq.s32.totalorder %s27, 0
      %p168 = por %p166, %p167
      %p169 = scmp.ne.s32.totalorder %s155, %s156
      %p170 = scmp.eq.s32.totalorder %s28, 1
      %p171 = por %p169, %p170
      %p173 = scmp.ne.s32.totalorder %s156, %s172
      %p174 = scmp.eq.s32.totalorder %s28, 0
      %p175 = por %p173, %p174
      %p176 = scmp.le.s32.totalorder 1, %s22
      %p177 = scmp.lt.s32.totalorder %s22, 3
      %p178 = pnand %p176, %p177
      %p179 = pneg %p178
      // Predicated region
      $region9: #{tpu_custom_call.1} parent=5 // pred_check
        _
      $region10: #{tpu_custom_call.1} parent=5 // pred_check_branch
        %181 = sbr.rel (%p178) target = $region12
      $region11: #{tpu_custom_call.1} parent=5 // pred_region
        %s182 = ssub.s32 %s22, 1
      $region12: #{tpu_custom_call.1} parent=5 // pred_fallthru
        _
      %p183 = scmp.lt.s32.totalorder %s22, 2
      // Predicated region
      $region13: #{tpu_custom_call.1} parent=5 // pred_check
        %p184 = pneg %p183
      $region14: #{tpu_custom_call.1} parent=5 // pred_check_branch
        %186 = sbr.rel (%p184) target = $region16
      $region15: #{tpu_custom_call.1} parent=5 // pred_region
        // Predicated region
        $region17: #{tpu_custom_call.1} parent=15 // pred_check
          %p187 = pneg %p54
        $region18: #{tpu_custom_call.1} parent=15 // pred_check_branch
          %189 = sbr.rel (%p187) target = $region20
        $region19: #{tpu_custom_call.1} parent=15 // pred_region
          %s190 = sand.u32 %s44, 1
          %s191 = scalar_lea.sflag [#allocation8], %s190
          %s192 = sand.u32 %s44, 1
          %s193 = smul.addr %s192, 8
          %s194 = scalar_lea.vmem [#allocation7], %s193
          %s196 = ssub.s32 128, 128
          %197 = vsyncadd %s191, %s196
          %s198 = smul.addr %s29, 128
          %s199 = scalar_lea.hbm %s0, %s198
          %s201 = sshll.u32 %s194, 4
          %s202 = int_to_ptr.vmem [resolvable:$true] %s201
          %204 = dma.hbm_to_vmem [thread:$0]  %s199, 128, %s202, %s191
        $region20: #{tpu_custom_call.1} parent=15 // pred_fallthru
          _
        // Predicated region
        $region21: #{tpu_custom_call.1} parent=15 // pred_check
          %p205 = pneg %p80
        $region22: #{tpu_custom_call.1} parent=15 // pred_check_branch
          %207 = sbr.rel (%p205) target = $region24
        $region23: #{tpu_custom_call.1} parent=15 // pred_region
          %s208 = sand.u32 %s22, 1
          %s209 = scalar_lea.sflag [#allocation11], %s208
          %s210 = sand.u32 %s70, 1
          %s211 = smul.addr %s210, 16
          %s212 = scalar_lea.vmem [#allocation10], %s211
          %s214 = ssub.s32 256, 256
          %215 = vsyncadd %s209, %s214
          %s216 = smul.addr %s29, 2
          %s217 = smul.addr %s216, 128
          %s218 = scalar_lea.hbm %s1, %s217
          %s219 = sshll.u32 %s212, 4
          %s220 = int_to_ptr.vmem [resolvable:$true] %s219
          %225 = dma.hbm_to_vmem [thread:$0]  %s218, 256, %s220, %s209, 128, 128, 8
        $region24: #{tpu_custom_call.1} parent=15 // pred_fallthru
          _
        // Predicated region
        $region25: #{tpu_custom_call.1} parent=15 // pred_check
          %p226 = pneg %p108
        $region26: #{tpu_custom_call.1} parent=15 // pred_check_branch
          %228 = sbr.rel (%p226) target = $region28
        $region27: #{tpu_custom_call.1} parent=15 // pred_region
          %s229 = sand.u32 %s22, 1
          %s230 = scalar_lea.sflag [#allocation11], %s229
          %s231 = sand.u32 %s98, 1
          %s232 = smul.addr %s231, 8
          %s233 = scalar_lea.vmem [#allocation12], %s232
          %s235 = ssub.s32 128, 128
          %236 = vsyncadd %s230, %s235
          %s237 = sadd.s32 %s30, %s29
          %s238 = smul.addr %s237, 128
          %s239 = scalar_lea.hbm %s2, %s238
          %s241 = sshll.u32 %s233, 4
          %s242 = int_to_ptr.vmem [resolvable:$true] %s241
          %244 = dma.hbm_to_vmem [thread:$0]  %s239, 128, %s242, %s230
        $region28: #{tpu_custom_call.1} parent=15 // pred_fallthru
          _
        // Predicated region
        $region29: #{tpu_custom_call.1} parent=15 // pred_check
          %p245 = pneg %p136
        $region30: #{tpu_custom_call.1} parent=15 // pred_check_branch
          %247 = sbr.rel (%p245) target = $region32
        $region31: #{tpu_custom_call.1} parent=15 // pred_region
          %s248 = sand.u32 %s126, 1
          %s249 = scalar_lea.sflag [#allocation14], %s248
          %s250 = sand.u32 %s126, 1
          %s251 = smul.addr %s250, 128
          %s252 = scalar_lea.vmem [#allocation13], %s251
          %s254 = ssub.s32 2048, 2048
          %255 = vsyncadd %s249, %s254
          %s256 = smul.addr %s29, 16
          %s257 = sadd.s32 %s30, %s256
          %s258 = smul.addr %s257, 128
          %s259 = scalar_lea.hbm %s3, %s258
          %s260 = sshll.u32 %s252, 4
          %s261 = int_to_ptr.vmem [resolvable:$true] %s260
          %266 = dma.hbm_to_vmem [thread:$0]  %s259, 2048, %s261, %s249, 128, 128, 8
        $region32: #{tpu_custom_call.1} parent=15 // pred_fallthru
          _
      $region16: #{tpu_custom_call.1} parent=5 // pred_fallthru
        _
      %p267 = scmp.le.s32.totalorder 1, %s22
      %p268 = scmp.lt.s32.totalorder %s22, 3
      %p269 = pnand %p267, %p268
      %p270 = pneg %p269
      // Predicated region
      $region33: #{tpu_custom_call.1} parent=5 // pred_check
        _
      $region34: #{tpu_custom_call.1} parent=5 // pred_check_branch
        %272 = sbr.rel (%p269) target = $region36
      $region35: #{tpu_custom_call.1} parent=5 // pred_region
        %s273 = ssub.s32 %s22, 1
        %s274 = sand.u32 %s47, 1
        %s275 = scalar_lea.sflag [#allocation8], %s274
        %s276 = sand.u32 %s47, 1
        %s277 = smul.addr %s276, 8
        %s278 = scalar_lea.vmem [#allocation7], %s277
        // Predicated region
        $region37: #{tpu_custom_call.1} parent=35 // pred_check
          %p279 = pneg %p60
        $region38: #{tpu_custom_call.1} parent=35 // pred_check_branch
          %281 = sbr.rel (%p279) target = $region40
        $region39: #{tpu_custom_call.1} parent=35 // pred_region
          %282 = dma.done %s275, 128
        $region40: #{tpu_custom_call.1} parent=35 // pred_fallthru
          _
        %s283 = sand.u32 %s27, 1
        %s284 = scalar_lea.sflag [#allocation11], %s283
        %s285 = sand.u32 %s73, 1
        %s286 = smul.addr %s285, 16
        %s287 = scalar_lea.vmem [#allocation10], %s286
        // Predicated region
        $region41: #{tpu_custom_call.1} parent=35 // pred_check
          %p288 = pneg %p86
        $region42: #{tpu_custom_call.1} parent=35 // pred_check_branch
          %290 = sbr.rel (%p288) target = $region44
        $region43: #{tpu_custom_call.1} parent=35 // pred_region
          %291 = dma.done %s284, 256
        $region44: #{tpu_custom_call.1} parent=35 // pred_fallthru
          _
        %s292 = sand.u32 %s27, 1
        %s293 = scalar_lea.sflag [#allocation11], %s292
        %s294 = sand.u32 %s101, 1
        %s295 = smul.addr %s294, 8
        %s296 = scalar_lea.vmem [#allocation12], %s295
        // Predicated region
        $region45: #{tpu_custom_call.1} parent=35 // pred_check
          %p297 = pneg %p114
        $region46: #{tpu_custom_call.1} parent=35 // pred_check_branch
          %299 = sbr.rel (%p297) target = $region48
        $region47: #{tpu_custom_call.1} parent=35 // pred_region
          %300 = dma.done %s293, 128
        $region48: #{tpu_custom_call.1} parent=35 // pred_fallthru
          _
        %s301 = sand.u32 %s129, 1
        %s302 = scalar_lea.sflag [#allocation14], %s301
        %s303 = sand.u32 %s129, 1
        %s304 = smul.addr %s303, 128
        %s305 = scalar_lea.vmem [#allocation13], %s304
        // Predicated region
        $region49: #{tpu_custom_call.1} parent=35 // pred_check
          %p306 = pneg %p142
        $region50: #{tpu_custom_call.1} parent=35 // pred_check_branch
          %308 = sbr.rel (%p306) target = $region52
        $region51: #{tpu_custom_call.1} parent=35 // pred_region
          %309 = dma.done %s302, 2048
        $region52: #{tpu_custom_call.1} parent=35 // pred_fallthru
          _
        %s310 = sand.u32 %s47, 1
        %s311 = scalar_lea.sflag [#allocation8], %s310
        %s312 = sand.u32 %s47, 1
        %s313 = smul.addr %s312, 8
        %s314 = scalar_lea.vmem [#allocation7], %s313
        %p315 = pneg %p60
        %p316 = pneg %p57
        %s317 = sand.u32 %s27, 1
        %s318 = scalar_lea.sflag [#allocation11], %s317
        %s319 = sand.u32 %s73, 1
        %s320 = smul.addr %s319, 16
        %s321 = scalar_lea.vmem [#allocation10], %s320
        %p322 = pneg %p86
        %p323 = pneg %p83
        %s324 = sand.u32 %s27, 1
        %s325 = scalar_lea.sflag [#allocation11], %s324
        %s326 = sand.u32 %s101, 1
        %s327 = smul.addr %s326, 8
        %s328 = scalar_lea.vmem [#allocation12], %s327
        %p329 = pneg %p114
        %p330 = pneg %p111
        %s331 = sand.u32 %s129, 1
        %s332 = scalar_lea.sflag [#allocation14], %s331
        %s333 = sand.u32 %s129, 1
        %s334 = smul.addr %s333, 128
        %s335 = scalar_lea.vmem [#allocation13], %s334
        %p336 = pneg %p142
        %p337 = pneg %p139
        %p338 = pneg %p168
        %p339 = pneg %p165
        %s340 = sand.u32 %s155, 1
        %s341 = scalar_lea.sflag [#allocation9], %s340
        %s342 = sand.u32 %s155, 1
        %s343 = smul.addr %s342, 8
        %s344 = scalar_lea.vmem [#allocation15], %s343
        %p345 = scmp.eq.s32.totalorder %s32, 0
        // Predicated region
        $region53: #{tpu_custom_call.1} parent=35 // pred_check
          %p346 = pneg %p345
        $region54: #{tpu_custom_call.1} parent=35 // pred_check_branch
          %348 = sbr.rel (%p346) target = $region56
        $region55: #{tpu_custom_call.1} parent=35 // pred_region
          %349 = vst [vmem:[#allocation2] sm:$0xff] 0.0
          %350 = vst [vmem:[#allocation3] sm:$0xff] 0.0
          %vm351 = vcmask 7168
          %352 = vst.msk [vmem:[#allocation4] sm:$0xff] %vm351, 0.0
          %353 = vst.msk [vmem:[#allocation5] sm:$0xff] %vm351, 0.0
          %354 = vst [vmem:[#allocation6] sm:$0x1] 0.0
        $region56: #{tpu_custom_call.1} parent=35 // pred_fallthru
          _
        %v355 = vld [vmem:[%s296] sm:$0xff]
        %v356 = vld [vmem:[%s305] sm:$0xff]
        %v357 = vld [vmem:[%s305 + $0x8] sm:$0xff]
        %v358 = vld [vmem:[%s305 + $0x10] sm:$0xff]
        %v359 = vld [vmem:[%s305 + $0x18] sm:$0xff]
        %v360 = vld [vmem:[%s305 + $0x20] sm:$0xff]
        %v361 = vld [vmem:[%s305 + $0x28] sm:$0xff]
        %v362 = vld [vmem:[%s305 + $0x30] sm:$0xff]
        %v363 = vld [vmem:[%s305 + $0x38] sm:$0xff]
        %v364 = vld [vmem:[%s305 + $0x40] sm:$0xff]
        %v365 = vld [vmem:[%s305 + $0x48] sm:$0xff]
        %v366 = vld [vmem:[%s305 + $0x50] sm:$0xff]
        %v367 = vld [vmem:[%s305 + $0x58] sm:$0xff]
        %v368 = vld [vmem:[%s305 + $0x60] sm:$0xff]
        %v369 = vld [vmem:[%s305 + $0x68] sm:$0xff]
        %v370 = vld [vmem:[%s305 + $0x70] sm:$0xff]
        %v371 = vld [vmem:[%s305 + $0x78] sm:$0xff]
        %v372 = vmul.f32 %v355, 0.5
        %v373 = vtanh.pop %v372
        %v374 = vadd.f32 %v373, 1.0
        %v375 = vmul.f32 %v374, 0.5
        %v376 = vmax.f32 %v355, 0.0
        %v377 = vand.u32 2147483647, %v355
        %v378 = vsub.f32 0.0, %v377
        %v379 = vmul.f32 %v378, 1.442695
        %v380 = vpow.pop %v379
        %v381 = vadd.f32 %v380, 1.0
        %v382 = vlog2.pop %v381
        %v383 = vmul.f32 %v382, 0.6931472
        %v384 = vadd.f32 %v376, %v383
        %v385 = vld [vmem:[#allocation4] sm:$0xff]
        %386 = vadd.xlane.f32.xlu0 %v384
        %v387 = vpop.xlane.xlu0 %386
        %v388 = vadd.f32 %v385, %v387
        %vm389 = vcmask 7168
        %390 = vst.msk [vmem:[#allocation4] sm:$0xff] %vm389, %v388
        %v391 = vld [vmem:[#allocation5] sm:$0xff]
        %392 = vadd.xlane.f32.xlu0 %v375
        %v393 = vpop.xlane.xlu0 %392
        %v394 = vadd.f32 %v391, %v393
        %395 = vst.msk [vmem:[#allocation5] sm:$0xff] %vm389, %v394
        %v396 = vld [vmem:[#allocation6] sm:$0x1]
        %397 = vadd.xlane.f32.xlu0 %v356
        %v398 = vpop.xlane.xlu0 %397
        %399 = vadd.xlane.f32.xlu0 %v357
        %v400 = vpop.xlane.xlu0 %399
        %401 = vadd.xlane.f32.xlu0 %v358
        %v402 = vpop.xlane.xlu0 %401
        %403 = vadd.xlane.f32.xlu0 %v359
        %v404 = vpop.xlane.xlu0 %403
        %405 = vadd.xlane.f32.xlu0 %v360
        %v406 = vpop.xlane.xlu0 %405
        %407 = vadd.xlane.f32.xlu0 %v361
        %v408 = vpop.xlane.xlu0 %407
        %409 = vadd.xlane.f32.xlu0 %v362
        %v410 = vpop.xlane.xlu0 %409
        %411 = vadd.xlane.f32.xlu0 %v363
        %v412 = vpop.xlane.xlu0 %411
        %413 = vadd.xlane.f32.xlu0 %v364
        %v414 = vpop.xlane.xlu0 %413
        %415 = vadd.xlane.f32.xlu0 %v365
        %v416 = vpop.xlane.xlu0 %415
        %417 = vadd.xlane.f32.xlu0 %v366
        %v418 = vpop.xlane.xlu0 %417
        %419 = vadd.xlane.f32.xlu0 %v367
        %v420 = vpop.xlane.xlu0 %419
        %421 = vadd.xlane.f32.xlu0 %v368
        %v422 = vpop.xlane.xlu0 %421
        %423 = vadd.xlane.f32.xlu0 %v369
        %v424 = vpop.xlane.xlu0 %423
        %425 = vadd.xlane.f32.xlu0 %v370
        %v426 = vpop.xlane.xlu0 %425
        %427 = vadd.xlane.f32.xlu0 %v371
        %v428 = vpop.xlane.xlu0 %427
        %v445 = vlaneseq
        %v446 = vshrl.u32 %v445, 7
        %v447 = vsub.s32 0, %v446
        %v448 = vrot.slane %v398, %v447
        %v449 = vlaneseq
        %v450 = vshrl.u32 %v449, 7
        %v451 = vsub.s32 1, %v450
        %v452 = vrot.slane %v398, %v451
        %v453 = vlaneseq
        %v454 = vshrl.u32 %v453, 7
        %v455 = vsub.s32 2, %v454
        %v456 = vrot.slane %v398, %v455
        %v457 = vlaneseq
        %v458 = vshrl.u32 %v457, 7
        %v459 = vsub.s32 3, %v458
        %v460 = vrot.slane %v398, %v459
        %v461 = vlaneseq
        %v462 = vshrl.u32 %v461, 7
        %v463 = vsub.s32 4, %v462
        %v464 = vrot.slane %v398, %v463
        %v465 = vlaneseq
        %v466 = vshrl.u32 %v465, 7
        %v467 = vsub.s32 5, %v466
        %v468 = vrot.slane %v398, %v467
        %v469 = vlaneseq
        %v470 = vshrl.u32 %v469, 7
        %v471 = vsub.s32 6, %v470
        %v472 = vrot.slane %v398, %v471
        %v473 = vlaneseq
        %v474 = vshrl.u32 %v473, 7
        %v475 = vsub.s32 7, %v474
        %v476 = vrot.slane %v398, %v475
        %v477 = vlaneseq
        %v478 = vshrl.u32 %v477, 7
        %v479 = vsub.s32 0, %v478
        %v480 = vrot.slane %v400, %v479
        %v481 = vlaneseq
        %v482 = vshrl.u32 %v481, 7
        %v483 = vsub.s32 1, %v482
        %v484 = vrot.slane %v400, %v483
        %v485 = vlaneseq
        %v486 = vshrl.u32 %v485, 7
        %v487 = vsub.s32 2, %v486
        %v488 = vrot.slane %v400, %v487
        %v489 = vlaneseq
        %v490 = vshrl.u32 %v489, 7
        %v491 = vsub.s32 3, %v490
        %v492 = vrot.slane %v400, %v491
        %v493 = vlaneseq
        %v494 = vshrl.u32 %v493, 7
        %v495 = vsub.s32 4, %v494
        %v496 = vrot.slane %v400, %v495
        %v497 = vlaneseq
        %v498 = vshrl.u32 %v497, 7
        %v499 = vsub.s32 5, %v498
        %v500 = vrot.slane %v400, %v499
        %v501 = vlaneseq
        %v502 = vshrl.u32 %v501, 7
        %v503 = vsub.s32 6, %v502
        %v504 = vrot.slane %v400, %v503
        %v505 = vlaneseq
        %v506 = vshrl.u32 %v505, 7
        %v507 = vsub.s32 7, %v506
        %v508 = vrot.slane %v400, %v507
        %v509 = vlaneseq
        %v510 = vshrl.u32 %v509, 7
        %v511 = vsub.s32 0, %v510
        %v512 = vrot.slane %v402, %v511
        %v513 = vlaneseq
        %v514 = vshrl.u32 %v513, 7
        %v515 = vsub.s32 1, %v514
        %v516 = vrot.slane %v402, %v515
        %v517 = vlaneseq
        %v518 = vshrl.u32 %v517, 7
        %v519 = vsub.s32 2, %v518
        %v520 = vrot.slane %v402, %v519
        %v521 = vlaneseq
        %v522 = vshrl.u32 %v521, 7
        %v523 = vsub.s32 3, %v522
        %v524 = vrot.slane %v402, %v523
        %v525 = vlaneseq
        %v526 = vshrl.u32 %v525, 7
        %v527 = vsub.s32 4, %v526
        %v528 = vrot.slane %v402, %v527
        %v529 = vlaneseq
        %v530 = vshrl.u32 %v529, 7
        %v531 = vsub.s32 5, %v530
        %v532 = vrot.slane %v402, %v531
        %v533 = vlaneseq
        %v534 = vshrl.u32 %v533, 7
        %v535 = vsub.s32 6, %v534
        %v536 = vrot.slane %v402, %v535
        %v537 = vlaneseq
        %v538 = vshrl.u32 %v537, 7
        %v539 = vsub.s32 7, %v538
        %v540 = vrot.slane %v402, %v539
        %v541 = vlaneseq
        %v542 = vshrl.u32 %v541, 7
        %v543 = vsub.s32 0, %v542
        %v544 = vrot.slane %v404, %v543
        %v545 = vlaneseq
        %v546 = vshrl.u32 %v545, 7
        %v547 = vsub.s32 1, %v546
        %v548 = vrot.slane %v404, %v547
        %v549 = vlaneseq
        %v550 = vshrl.u32 %v549, 7
        %v551 = vsub.s32 2, %v550
        %v552 = vrot.slane %v404, %v551
        %v553 = vlaneseq
        %v554 = vshrl.u32 %v553, 7
        %v555 = vsub.s32 3, %v554
        %v556 = vrot.slane %v404, %v555
        %v557 = vlaneseq
        %v558 = vshrl.u32 %v557, 7
        %v559 = vsub.s32 4, %v558
        %v560 = vrot.slane %v404, %v559
        %v561 = vlaneseq
        %v562 = vshrl.u32 %v561, 7
        %v563 = vsub.s32 5, %v562
        %v564 = vrot.slane %v404, %v563
        %v565 = vlaneseq
        %v566 = vshrl.u32 %v565, 7
        %v567 = vsub.s32 6, %v566
        %v568 = vrot.slane %v404, %v567
        %v569 = vlaneseq
        %v570 = vshrl.u32 %v569, 7
        %v571 = vsub.s32 7, %v570
        %v572 = vrot.slane %v404, %v571
        %v573 = vlaneseq
        %v574 = vshrl.u32 %v573, 7
        %v575 = vsub.s32 0, %v574
        %v576 = vrot.slane %v406, %v575
        %v577 = vlaneseq
        %v578 = vshrl.u32 %v577, 7
        %v579 = vsub.s32 1, %v578
        %v580 = vrot.slane %v406, %v579
        %v581 = vlaneseq
        %v582 = vshrl.u32 %v581, 7
        %v583 = vsub.s32 2, %v582
        %v584 = vrot.slane %v406, %v583
        %v585 = vlaneseq
        %v586 = vshrl.u32 %v585, 7
        %v587 = vsub.s32 3, %v586
        %v588 = vrot.slane %v406, %v587
        %v589 = vlaneseq
        %v590 = vshrl.u32 %v589, 7
        %v591 = vsub.s32 4, %v590
        %v592 = vrot.slane %v406, %v591
        %v593 = vlaneseq
        %v594 = vshrl.u32 %v593, 7
        %v595 = vsub.s32 5, %v594
        %v596 = vrot.slane %v406, %v595
        %v597 = vlaneseq
        %v598 = vshrl.u32 %v597, 7
        %v599 = vsub.s32 6, %v598
        %v600 = vrot.slane %v406, %v599
        %v601 = vlaneseq
        %v602 = vshrl.u32 %v601, 7
        %v603 = vsub.s32 7, %v602
        %v604 = vrot.slane %v406, %v603
        %v605 = vlaneseq
        %v606 = vshrl.u32 %v605, 7
        %v607 = vsub.s32 0, %v606
        %v608 = vrot.slane %v408, %v607
        %v609 = vlaneseq
        %v610 = vshrl.u32 %v609, 7
        %v611 = vsub.s32 1, %v610
        %v612 = vrot.slane %v408, %v611
        %v613 = vlaneseq
        %v614 = vshrl.u32 %v613, 7
        %v615 = vsub.s32 2, %v614
        %v616 = vrot.slane %v408, %v615
        %v617 = vlaneseq
        %v618 = vshrl.u32 %v617, 7
        %v619 = vsub.s32 3, %v618
        %v620 = vrot.slane %v408, %v619
        %v621 = vlaneseq
        %v622 = vshrl.u32 %v621, 7
        %v623 = vsub.s32 4, %v622
        %v624 = vrot.slane %v408, %v623
        %v625 = vlaneseq
        %v626 = vshrl.u32 %v625, 7
        %v627 = vsub.s32 5, %v626
        %v628 = vrot.slane %v408, %v627
        %v629 = vlaneseq
        %v630 = vshrl.u32 %v629, 7
        %v631 = vsub.s32 6, %v630
        %v632 = vrot.slane %v408, %v631
        %v633 = vlaneseq
        %v634 = vshrl.u32 %v633, 7
        %v635 = vsub.s32 7, %v634
        %v636 = vrot.slane %v408, %v635
        %v637 = vlaneseq
        %v638 = vshrl.u32 %v637, 7
        %v639 = vsub.s32 0, %v638
        %v640 = vrot.slane %v410, %v639
        %v641 = vlaneseq
        %v642 = vshrl.u32 %v641, 7
        %v643 = vsub.s32 1, %v642
        %v644 = vrot.slane %v410, %v643
        %v645 = vlaneseq
        %v646 = vshrl.u32 %v645, 7
        %v647 = vsub.s32 2, %v646
        %v648 = vrot.slane %v410, %v647
        %v649 = vlaneseq
        %v650 = vshrl.u32 %v649, 7
        %v651 = vsub.s32 3, %v650
        %v652 = vrot.slane %v410, %v651
        %v653 = vlaneseq
        %v654 = vshrl.u32 %v653, 7
        %v655 = vsub.s32 4, %v654
        %v656 = vrot.slane %v410, %v655
        %v657 = vlaneseq
        %v658 = vshrl.u32 %v657, 7
        %v659 = vsub.s32 5, %v658
        %v660 = vrot.slane %v410, %v659
        %v661 = vlaneseq
        %v662 = vshrl.u32 %v661, 7
        %v663 = vsub.s32 6, %v662
        %v664 = vrot.slane %v410, %v663
        %v665 = vlaneseq
        %v666 = vshrl.u32 %v665, 7
        %v667 = vsub.s32 7, %v666
        %v668 = vrot.slane %v410, %v667
        %v669 = vlaneseq
        %v670 = vshrl.u32 %v669, 7
        %v671 = vsub.s32 0, %v670
        %v672 = vrot.slane %v412, %v671
        %v673 = vlaneseq
        %v674 = vshrl.u32 %v673, 7
        %v675 = vsub.s32 1, %v674
        %v676 = vrot.slane %v412, %v675
        %v677 = vlaneseq
        %v678 = vshrl.u32 %v677, 7
        %v679 = vsub.s32 2, %v678
        %v680 = vrot.slane %v412, %v679
        %v681 = vlaneseq
        %v682 = vshrl.u32 %v681, 7
        %v683 = vsub.s32 3, %v682
        %v684 = vrot.slane %v412, %v683
        %v685 = vlaneseq
        %v686 = vshrl.u32 %v685, 7
        %v687 = vsub.s32 4, %v686
        %v688 = vrot.slane %v412, %v687
        %v689 = vlaneseq
        %v690 = vshrl.u32 %v689, 7
        %v691 = vsub.s32 5, %v690
        %v692 = vrot.slane %v412, %v691
        %v693 = vlaneseq
        %v694 = vshrl.u32 %v693, 7
        %v695 = vsub.s32 6, %v694
        %v696 = vrot.slane %v412, %v695
        %v697 = vlaneseq
        %v698 = vshrl.u32 %v697, 7
        %v699 = vsub.s32 7, %v698
        %v700 = vrot.slane %v412, %v699
        %v701 = vlaneseq
        %v702 = vshrl.u32 %v701, 7
        %v703 = vsub.s32 0, %v702
        %v704 = vrot.slane %v414, %v703
        %v705 = vlaneseq
        %v706 = vshrl.u32 %v705, 7
        %v707 = vsub.s32 1, %v706
        %v708 = vrot.slane %v414, %v707
        %v709 = vlaneseq
        %v710 = vshrl.u32 %v709, 7
        %v711 = vsub.s32 2, %v710
        %v712 = vrot.slane %v414, %v711
        %v713 = vlaneseq
        %v714 = vshrl.u32 %v713, 7
        %v715 = vsub.s32 3, %v714
        %v716 = vrot.slane %v414, %v715
        %v717 = vlaneseq
        %v718 = vshrl.u32 %v717, 7
        %v719 = vsub.s32 4, %v718
        %v720 = vrot.slane %v414, %v719
        %v721 = vlaneseq
        %v722 = vshrl.u32 %v721, 7
        %v723 = vsub.s32 5, %v722
        %v724 = vrot.slane %v414, %v723
        %v725 = vlaneseq
        %v726 = vshrl.u32 %v725, 7
        %v727 = vsub.s32 6, %v726
        %v728 = vrot.slane %v414, %v727
        %v729 = vlaneseq
        %v730 = vshrl.u32 %v729, 7
        %v731 = vsub.s32 7, %v730
        %v732 = vrot.slane %v414, %v731
        %v733 = vlaneseq
        %v734 = vshrl.u32 %v733, 7
        %v735 = vsub.s32 0, %v734
        %v736 = vrot.slane %v416, %v735
        %v737 = vlaneseq
        %v738 = vshrl.u32 %v737, 7
        %v739 = vsub.s32 1, %v738
        %v740 = vrot.slane %v416, %v739
        %v741 = vlaneseq
        %v742 = vshrl.u32 %v741, 7
        %v743 = vsub.s32 2, %v742
        %v744 = vrot.slane %v416, %v743
        %v745 = vlaneseq
        %v746 = vshrl.u32 %v745, 7
        %v747 = vsub.s32 3, %v746
        %v748 = vrot.slane %v416, %v747
        %v749 = vlaneseq
        %v750 = vshrl.u32 %v749, 7
        %v751 = vsub.s32 4, %v750
        %v752 = vrot.slane %v416, %v751
        %v753 = vlaneseq
        %v754 = vshrl.u32 %v753, 7
        %v755 = vsub.s32 5, %v754
        %v756 = vrot.slane %v416, %v755
        %v757 = vlaneseq
        %v758 = vshrl.u32 %v757, 7
        %v759 = vsub.s32 6, %v758
        %v760 = vrot.slane %v416, %v759
        %v761 = vlaneseq
        %v762 = vshrl.u32 %v761, 7
        %v763 = vsub.s32 7, %v762
        %v764 = vrot.slane %v416, %v763
        %v765 = vlaneseq
        %v766 = vshrl.u32 %v765, 7
        %v767 = vsub.s32 0, %v766
        %v768 = vrot.slane %v418, %v767
        %v769 = vlaneseq
        %v770 = vshrl.u32 %v769, 7
        %v771 = vsub.s32 1, %v770
        %v772 = vrot.slane %v418, %v771
        %v773 = vlaneseq
        %v774 = vshrl.u32 %v773, 7
        %v775 = vsub.s32 2, %v774
        %v776 = vrot.slane %v418, %v775
        %v777 = vlaneseq
        %v778 = vshrl.u32 %v777, 7
        %v779 = vsub.s32 3, %v778
        %v780 = vrot.slane %v418, %v779
        %v781 = vlaneseq
        %v782 = vshrl.u32 %v781, 7
        %v783 = vsub.s32 4, %v782
        %v784 = vrot.slane %v418, %v783
        %v785 = vlaneseq
        %v786 = vshrl.u32 %v785, 7
        %v787 = vsub.s32 5, %v786
        %v788 = vrot.slane %v418, %v787
        %v789 = vlaneseq
        %v790 = vshrl.u32 %v789, 7
        %v791 = vsub.s32 6, %v790
        %v792 = vrot.slane %v418, %v791
        %v793 = vlaneseq
        %v794 = vshrl.u32 %v793, 7
        %v795 = vsub.s32 7, %v794
        %v796 = vrot.slane %v418, %v795
        %v797 = vlaneseq
        %v798 = vshrl.u32 %v797, 7
        %v799 = vsub.s32 0, %v798
        %v800 = vrot.slane %v420, %v799
        %v801 = vlaneseq
        %v802 = vshrl.u32 %v801, 7
        %v803 = vsub.s32 1, %v802
        %v804 = vrot.slane %v420, %v803
        %v805 = vlaneseq
        %v806 = vshrl.u32 %v805, 7
        %v807 = vsub.s32 2, %v806
        %v808 = vrot.slane %v420, %v807
        %v809 = vlaneseq
        %v810 = vshrl.u32 %v809, 7
        %v811 = vsub.s32 3, %v810
        %v812 = vrot.slane %v420, %v811
        %v813 = vlaneseq
        %v814 = vshrl.u32 %v813, 7
        %v815 = vsub.s32 4, %v814
        %v816 = vrot.slane %v420, %v815
        %v817 = vlaneseq
        %v818 = vshrl.u32 %v817, 7
        %v819 = vsub.s32 5, %v818
        %v820 = vrot.slane %v420, %v819
        %v821 = vlaneseq
        %v822 = vshrl.u32 %v821, 7
        %v823 = vsub.s32 6, %v822
        %v824 = vrot.slane %v420, %v823
        %v825 = vlaneseq
        %v826 = vshrl.u32 %v825, 7
        %v827 = vsub.s32 7, %v826
        %v828 = vrot.slane %v420, %v827
        %v829 = vlaneseq
        %v830 = vshrl.u32 %v829, 7
        %v831 = vsub.s32 0, %v830
        %v832 = vrot.slane %v422, %v831
        %v833 = vlaneseq
        %v834 = vshrl.u32 %v833, 7
        %v835 = vsub.s32 1, %v834
        %v836 = vrot.slane %v422, %v835
        %v837 = vlaneseq
        %v838 = vshrl.u32 %v837, 7
        %v839 = vsub.s32 2, %v838
        %v840 = vrot.slane %v422, %v839
        %v841 = vlaneseq
        %v842 = vshrl.u32 %v841, 7
        %v843 = vsub.s32 3, %v842
        %v844 = vrot.slane %v422, %v843
        %v845 = vlaneseq
        %v846 = vshrl.u32 %v845, 7
        %v847 = vsub.s32 4, %v846
        %v848 = vrot.slane %v422, %v847
        %v849 = vlaneseq
        %v850 = vshrl.u32 %v849, 7
        %v851 = vsub.s32 5, %v850
        %v852 = vrot.slane %v422, %v851
        %v853 = vlaneseq
        %v854 = vshrl.u32 %v853, 7
        %v855 = vsub.s32 6, %v854
        %v856 = vrot.slane %v422, %v855
        %v857 = vlaneseq
        %v858 = vshrl.u32 %v857, 7
        %v859 = vsub.s32 7, %v858
        %v860 = vrot.slane %v422, %v859
        %v861 = vlaneseq
        %v862 = vshrl.u32 %v861, 7
        %v863 = vsub.s32 0, %v862
        %v864 = vrot.slane %v424, %v863
        %v865 = vlaneseq
        %v866 = vshrl.u32 %v865, 7
        %v867 = vsub.s32 1, %v866
        %v868 = vrot.slane %v424, %v867
        %v869 = vlaneseq
        %v870 = vshrl.u32 %v869, 7
        %v871 = vsub.s32 2, %v870
        %v872 = vrot.slane %v424, %v871
        %v873 = vlaneseq
        %v874 = vshrl.u32 %v873, 7
        %v875 = vsub.s32 3, %v874
        %v876 = vrot.slane %v424, %v875
        %v877 = vlaneseq
        %v878 = vshrl.u32 %v877, 7
        %v879 = vsub.s32 4, %v878
        %v880 = vrot.slane %v424, %v879
        %v881 = vlaneseq
        %v882 = vshrl.u32 %v881, 7
        %v883 = vsub.s32 5, %v882
        %v884 = vrot.slane %v424, %v883
        %v885 = vlaneseq
        %v886 = vshrl.u32 %v885, 7
        %v887 = vsub.s32 6, %v886
        %v888 = vrot.slane %v424, %v887
        %v889 = vlaneseq
        %v890 = vshrl.u32 %v889, 7
        %v891 = vsub.s32 7, %v890
        %v892 = vrot.slane %v424, %v891
        %v893 = vlaneseq
        %v894 = vshrl.u32 %v893, 7
        %v895 = vsub.s32 0, %v894
        %v896 = vrot.slane %v426, %v895
        %v897 = vlaneseq
        %v898 = vshrl.u32 %v897, 7
        %v899 = vsub.s32 1, %v898
        %v900 = vrot.slane %v426, %v899
        %v901 = vlaneseq
        %v902 = vshrl.u32 %v901, 7
        %v903 = vsub.s32 2, %v902
        %v904 = vrot.slane %v426, %v903
        %v905 = vlaneseq
        %v906 = vshrl.u32 %v905, 7
        %v907 = vsub.s32 3, %v906
        %v908 = vrot.slane %v426, %v907
        %v909 = vlaneseq
        %v910 = vshrl.u32 %v909, 7
        %v911 = vsub.s32 4, %v910
        %v912 = vrot.slane %v426, %v911
        %v913 = vlaneseq
        %v914 = vshrl.u32 %v913, 7
        %v915 = vsub.s32 5, %v914
        %v916 = vrot.slane %v426, %v915
        %v917 = vlaneseq
        %v918 = vshrl.u32 %v917, 7
        %v919 = vsub.s32 6, %v918
        %v920 = vrot.slane %v426, %v919
        %v921 = vlaneseq
        %v922 = vshrl.u32 %v921, 7
        %v923 = vsub.s32 7, %v922
        %v924 = vrot.slane %v426, %v923
        %v925 = vlaneseq
        %v926 = vshrl.u32 %v925, 7
        %v927 = vsub.s32 0, %v926
        %v928 = vrot.slane %v428, %v927
        %v929 = vlaneseq
        %v930 = vshrl.u32 %v929, 7
        %v931 = vsub.s32 1, %v930
        %v932 = vrot.slane %v428, %v931
        %v933 = vlaneseq
        %v934 = vshrl.u32 %v933, 7
        %v935 = vsub.s32 2, %v934
        %v936 = vrot.slane %v428, %v935
        %v937 = vlaneseq
        %v938 = vshrl.u32 %v937, 7
        %v939 = vsub.s32 3, %v938
        %v940 = vrot.slane %v428, %v939
        %v941 = vlaneseq
        %v942 = vshrl.u32 %v941, 7
        %v943 = vsub.s32 4, %v942
        %v944 = vrot.slane %v428, %v943
        %v945 = vlaneseq
        %v946 = vshrl.u32 %v945, 7
        %v947 = vsub.s32 5, %v946
        %v948 = vrot.slane %v428, %v947
        %v949 = vlaneseq
        %v950 = vshrl.u32 %v949, 7
        %v951 = vsub.s32 6, %v950
        %v952 = vrot.slane %v428, %v951
        %v953 = vlaneseq
        %v954 = vshrl.u32 %v953, 7
        %v955 = vsub.s32 7, %v954
        %v956 = vrot.slane %v428, %v955
        %v957 = vcombine.low %v448, %v452
        %v958 = vcombine.low %v456, %v460
        %v959 = vcombine.low %v464, %v468
        %v960 = vcombine.low %v472, %v476
        %v962 = vunpack.c.l.s4 1966171168
        %v963 = vunpack.c.0.s8 %v962
        %v964 = vlaneseq
        %v965 = vshrl.u32 %v964, 7
        %v966 = vsub.s32 %v963, %v965
        %v967 = vrot.slane %v957, %v966
        %v969 = vunpack.c.l.s4 1966171168
        %v970 = vunpack.c.0.s8 %v969
        %v971 = vlaneseq
        %v972 = vshrl.u32 %v971, 7
        %v973 = vsub.s32 %v970, %v972
        %v974 = vrot.slane %v958, %v973
        %v976 = vunpack.c.l.s4 1966171168
        %v977 = vunpack.c.0.s8 %v976
        %v978 = vlaneseq
        %v979 = vshrl.u32 %v978, 7
        %v980 = vsub.s32 %v977, %v979
        %v981 = vrot.slane %v959, %v980
        %v983 = vunpack.c.l.s4 1966171168
        %v984 = vunpack.c.0.s8 %v983
        %v985 = vlaneseq
        %v986 = vshrl.u32 %v985, 7
        %v987 = vsub.s32 %v984, %v986
        %v988 = vrot.slane %v960, %v987
        %v989 = vcombine.low %v967, %v974
        %v990 = vcombine.low %v981, %v988
        %v992 = vunpack.c.l.s4 1966171168
        %v993 = vunpack.c.0.s8 %v992
        %v994 = vlaneseq
        %v995 = vshrl.u32 %v994, 7
        %v996 = vsub.s32 %v993, %v995
        %v997 = vrot.slane %v989, %v996
        %v999 = vunpack.c.l.s4 1966171168
        %v1000 = vunpack.c.0.s8 %v999
        %v1001 = vlaneseq
        %v1002 = vshrl.u32 %v1001, 7
        %v1003 = vsub.s32 %v1000, %v1002
        %v1004 = vrot.slane %v990, %v1003
        %v1005 = vcombine.low %v997, %v1004
        %v1006 = vcombine.low %v480, %v484
        %v1007 = vcombine.low %v488, %v492
        %v1008 = vcombine.low %v496, %v500
        %v1009 = vcombine.low %v504, %v508
        %v1011 = vunpack.c.l.s4 1966171168
        %v1012 = vunpack.c.0.s8 %v1011
        %v1013 = vlaneseq
        %v1014 = vshrl.u32 %v1013, 7
        %v1015 = vsub.s32 %v1012, %v1014
        %v1016 = vrot.slane %v1006, %v1015
        %v1018 = vunpack.c.l.s4 1966171168
        %v1019 = vunpack.c.0.s8 %v1018
        %v1020 = vlaneseq
        %v1021 = vshrl.u32 %v1020, 7
        %v1022 = vsub.s32 %v1019, %v1021
        %v1023 = vrot.slane %v1007, %v1022
        %v1025 = vunpack.c.l.s4 1966171168
        %v1026 = vunpack.c.0.s8 %v1025
        %v1027 = vlaneseq
        %v1028 = vshrl.u32 %v1027, 7
        %v1029 = vsub.s32 %v1026, %v1028
        %v1030 = vrot.slane %v1008, %v1029
        %v1032 = vunpack.c.l.s4 1966171168
        %v1033 = vunpack.c.0.s8 %v1032
        %v1034 = vlaneseq
        %v1035 = vshrl.u32 %v1034, 7
        %v1036 = vsub.s32 %v1033, %v1035
        %v1037 = vrot.slane %v1009, %v1036
        %v1038 = vcombine.low %v1016, %v1023
        %v1039 = vcombine.low %v1030, %v1037
        %v1041 = vunpack.c.l.s4 1966171168
        %v1042 = vunpack.c.0.s8 %v1041
        %v1043 = vlaneseq
        %v1044 = vshrl.u32 %v1043, 7
        %v1045 = vsub.s32 %v1042, %v1044
        %v1046 = vrot.slane %v1038, %v1045
        %v1048 = vunpack.c.l.s4 1966171168
        %v1049 = vunpack.c.0.s8 %v1048
        %v1050 = vlaneseq
        %v1051 = vshrl.u32 %v1050, 7
        %v1052 = vsub.s32 %v1049, %v1051
        %v1053 = vrot.slane %v1039, %v1052
        %v1054 = vcombine.low %v1046, %v1053
        %v1055 = vcombine.low %v512, %v516
        %v1056 = vcombine.low %v520, %v524
        %v1057 = vcombine.low %v528, %v532
        %v1058 = vcombine.low %v536, %v540
        %v1060 = vunpack.c.l.s4 1966171168
        %v1061 = vunpack.c.0.s8 %v1060
        %v1062 = vlaneseq
        %v1063 = vshrl.u32 %v1062, 7
        %v1064 = vsub.s32 %v1061, %v1063
        %v1065 = vrot.slane %v1055, %v1064
        %v1067 = vunpack.c.l.s4 1966171168
        %v1068 = vunpack.c.0.s8 %v1067
        %v1069 = vlaneseq
        %v1070 = vshrl.u32 %v1069, 7
        %v1071 = vsub.s32 %v1068, %v1070
        %v1072 = vrot.slane %v1056, %v1071
        %v1074 = vunpack.c.l.s4 1966171168
        %v1075 = vunpack.c.0.s8 %v1074
        %v1076 = vlaneseq
        %v1077 = vshrl.u32 %v1076, 7
        %v1078 = vsub.s32 %v1075, %v1077
        %v1079 = vrot.slane %v1057, %v1078
        %v1081 = vunpack.c.l.s4 1966171168
        %v1082 = vunpack.c.0.s8 %v1081
        %v1083 = vlaneseq
        %v1084 = vshrl.u32 %v1083, 7
        %v1085 = vsub.s32 %v1082, %v1084
        %v1086 = vrot.slane %v1058, %v1085
        %v1087 = vcombine.low %v1065, %v1072
        %v1088 = vcombine.low %v1079, %v1086
        %v1090 = vunpack.c.l.s4 1966171168
        %v1091 = vunpack.c.0.s8 %v1090
        %v1092 = vlaneseq
        %v1093 = vshrl.u32 %v1092, 7
        %v1094 = vsub.s32 %v1091, %v1093
        %v1095 = vrot.slane %v1087, %v1094
        %v1097 = vunpack.c.l.s4 1966171168
        %v1098 = vunpack.c.0.s8 %v1097
        %v1099 = vlaneseq
        %v1100 = vshrl.u32 %v1099, 7
        %v1101 = vsub.s32 %v1098, %v1100
        %v1102 = vrot.slane %v1088, %v1101
        %v1103 = vcombine.low %v1095, %v1102
        %v1104 = vcombine.low %v544, %v548
        %v1105 = vcombine.low %v552, %v556
        %v1106 = vcombine.low %v560, %v564
        %v1107 = vcombine.low %v568, %v572
        %v1109 = vunpack.c.l.s4 1966171168
        %v1110 = vunpack.c.0.s8 %v1109
        %v1111 = vlaneseq
        %v1112 = vshrl.u32 %v1111, 7
        %v1113 = vsub.s32 %v1110, %v1112
        %v1114 = vrot.slane %v1104, %v1113
        %v1116 = vunpack.c.l.s4 1966171168
        %v1117 = vunpack.c.0.s8 %v1116
        %v1118 = vlaneseq
        %v1119 = vshrl.u32 %v1118, 7
        %v1120 = vsub.s32 %v1117, %v1119
        %v1121 = vrot.slane %v1105, %v1120
        %v1123 = vunpack.c.l.s4 1966171168
        %v1124 = vunpack.c.0.s8 %v1123
        %v1125 = vlaneseq
        %v1126 = vshrl.u32 %v1125, 7
        %v1127 = vsub.s32 %v1124, %v1126
        %v1128 = vrot.slane %v1106, %v1127
        %v1130 = vunpack.c.l.s4 1966171168
        %v1131 = vunpack.c.0.s8 %v1130
        %v1132 = vlaneseq
        %v1133 = vshrl.u32 %v1132, 7
        %v1134 = vsub.s32 %v1131, %v1133
        %v1135 = vrot.slane %v1107, %v1134
        %v1136 = vcombine.low %v1114, %v1121
        %v1137 = vcombine.low %v1128, %v1135
        %v1139 = vunpack.c.l.s4 1966171168
        %v1140 = vunpack.c.0.s8 %v1139
        %v1141 = vlaneseq
        %v1142 = vshrl.u32 %v1141, 7
        %v1143 = vsub.s32 %v1140, %v1142
        %v1144 = vrot.slane %v1136, %v1143
        %v1146 = vunpack.c.l.s4 1966171168
        %v1147 = vunpack.c.0.s8 %v1146
        %v1148 = vlaneseq
        %v1149 = vshrl.u32 %v1148, 7
        %v1150 = vsub.s32 %v1147, %v1149
        %v1151 = vrot.slane %v1137, %v1150
        %v1152 = vcombine.low %v1144, %v1151
        %v1153 = vcombine.low %v576, %v580
        %v1154 = vcombine.low %v584, %v588
        %v1155 = vcombine.low %v592, %v596
        %v1156 = vcombine.low %v600, %v604
        %v1158 = vunpack.c.l.s4 1966171168
        %v1159 = vunpack.c.0.s8 %v1158
        %v1160 = vlaneseq
        %v1161 = vshrl.u32 %v1160, 7
        %v1162 = vsub.s32 %v1159, %v1161
        %v1163 = vrot.slane %v1153, %v1162
        %v1165 = vunpack.c.l.s4 1966171168
        %v1166 = vunpack.c.0.s8 %v1165
        %v1167 = vlaneseq
        %v1168 = vshrl.u32 %v1167, 7
        %v1169 = vsub.s32 %v1166, %v1168
        %v1170 = vrot.slane %v1154, %v1169
        %v1172 = vunpack.c.l.s4 1966171168
        %v1173 = vunpack.c.0.s8 %v1172
        %v1174 = vlaneseq
        %v1175 = vshrl.u32 %v1174, 7
        %v1176 = vsub.s32 %v1173, %v1175
        %v1177 = vrot.slane %v1155, %v1176
        %v1179 = vunpack.c.l.s4 1966171168
        %v1180 = vunpack.c.0.s8 %v1179
        %v1181 = vlaneseq
        %v1182 = vshrl.u32 %v1181, 7
        %v1183 = vsub.s32 %v1180, %v1182
        %v1184 = vrot.slane %v1156, %v1183
        %v1185 = vcombine.low %v1163, %v1170
        %v1186 = vcombine.low %v1177, %v1184
        %v1188 = vunpack.c.l.s4 1966171168
        %v1189 = vunpack.c.0.s8 %v1188
        %v1190 = vlaneseq
        %v1191 = vshrl.u32 %v1190, 7
        %v1192 = vsub.s32 %v1189, %v1191
        %v1193 = vrot.slane %v1185, %v1192
        %v1195 = vunpack.c.l.s4 1966171168
        %v1196 = vunpack.c.0.s8 %v1195
        %v1197 = vlaneseq
        %v1198 = vshrl.u32 %v1197, 7
        %v1199 = vsub.s32 %v1196, %v1198
        %v1200 = vrot.slane %v1186, %v1199
        %v1201 = vcombine.low %v1193, %v1200
        %v1202 = vcombine.low %v608, %v612
        %v1203 = vcombine.low %v616, %v620
        %v1204 = vcombine.low %v624, %v628
        %v1205 = vcombine.low %v632, %v636
        %v1207 = vunpack.c.l.s4 1966171168
        %v1208 = vunpack.c.0.s8 %v1207
        %v1209 = vlaneseq
        %v1210 = vshrl.u32 %v1209, 7
        %v1211 = vsub.s32 %v1208, %v1210
        %v1212 = vrot.slane %v1202, %v1211
        %v1214 = vunpack.c.l.s4 1966171168
        %v1215 = vunpack.c.0.s8 %v1214
        %v1216 = vlaneseq
        %v1217 = vshrl.u32 %v1216, 7
        %v1218 = vsub.s32 %v1215, %v1217
        %v1219 = vrot.slane %v1203, %v1218
        %v1221 = vunpack.c.l.s4 1966171168
        %v1222 = vunpack.c.0.s8 %v1221
        %v1223 = vlaneseq
        %v1224 = vshrl.u32 %v1223, 7
        %v1225 = vsub.s32 %v1222, %v1224
        %v1226 = vrot.slane %v1204, %v1225
        %v1228 = vunpack.c.l.s4 1966171168
        %v1229 = vunpack.c.0.s8 %v1228
        %v1230 = vlaneseq
        %v1231 = vshrl.u32 %v1230, 7
        %v1232 = vsub.s32 %v1229, %v1231
        %v1233 = vrot.slane %v1205, %v1232
        %v1234 = vcombine.low %v1212, %v1219
        %v1235 = vcombine.low %v1226, %v1233
        %v1237 = vunpack.c.l.s4 1966171168
        %v1238 = vunpack.c.0.s8 %v1237
        %v1239 = vlaneseq
        %v1240 = vshrl.u32 %v1239, 7
        %v1241 = vsub.s32 %v1238, %v1240
        %v1242 = vrot.slane %v1234, %v1241
        %v1244 = vunpack.c.l.s4 1966171168
        %v1245 = vunpack.c.0.s8 %v1244
        %v1246 = vlaneseq
        %v1247 = vshrl.u32 %v1246, 7
        %v1248 = vsub.s32 %v1245, %v1247
        %v1249 = vrot.slane %v1235, %v1248
        %v1250 = vcombine.low %v1242, %v1249
        %v1251 = vcombine.low %v640, %v644
        %v1252 = vcombine.low %v648, %v652
        %v1253 = vcombine.low %v656, %v660
        %v1254 = vcombine.low %v664, %v668
        %v1256 = vunpack.c.l.s4 1966171168
        %v1257 = vunpack.c.0.s8 %v1256
        %v1258 = vlaneseq
        %v1259 = vshrl.u32 %v1258, 7
        %v1260 = vsub.s32 %v1257, %v1259
        %v1261 = vrot.slane %v1251, %v1260
        %v1263 = vunpack.c.l.s4 1966171168
        %v1264 = vunpack.c.0.s8 %v1263
        %v1265 = vlaneseq
        %v1266 = vshrl.u32 %v1265, 7
        %v1267 = vsub.s32 %v1264, %v1266
        %v1268 = vrot.slane %v1252, %v1267
        %v1270 = vunpack.c.l.s4 1966171168
        %v1271 = vunpack.c.0.s8 %v1270
        %v1272 = vlaneseq
        %v1273 = vshrl.u32 %v1272, 7
        %v1274 = vsub.s32 %v1271, %v1273
        %v1275 = vrot.slane %v1253, %v1274
        %v1277 = vunpack.c.l.s4 1966171168
        %v1278 = vunpack.c.0.s8 %v1277
        %v1279 = vlaneseq
        %v1280 = vshrl.u32 %v1279, 7
        %v1281 = vsub.s32 %v1278, %v1280
        %v1282 = vrot.slane %v1254, %v1281
        %v1283 = vcombine.low %v1261, %v1268
        %v1284 = vcombine.low %v1275, %v1282
        %v1286 = vunpack.c.l.s4 1966171168
        %v1287 = vunpack.c.0.s8 %v1286
        %v1288 = vlaneseq
        %v1289 = vshrl.u32 %v1288, 7
        %v1290 = vsub.s32 %v1287, %v1289
        %v1291 = vrot.slane %v1283, %v1290
        %v1293 = vunpack.c.l.s4 1966171168
        %v1294 = vunpack.c.0.s8 %v1293
        %v1295 = vlaneseq
        %v1296 = vshrl.u32 %v1295, 7
        %v1297 = vsub.s32 %v1294, %v1296
        %v1298 = vrot.slane %v1284, %v1297
        %v1299 = vcombine.low %v1291, %v1298
        %v1300 = vcombine.low %v672, %v676
        %v1301 = vcombine.low %v680, %v684
        %v1302 = vcombine.low %v688, %v692
        %v1303 = vcombine.low %v696, %v700
        %v1305 = vunpack.c.l.s4 1966171168
        %v1306 = vunpack.c.0.s8 %v1305
        %v1307 = vlaneseq
        %v1308 = vshrl.u32 %v1307, 7
        %v1309 = vsub.s32 %v1306, %v1308
        %v1310 = vrot.slane %v1300, %v1309
        %v1312 = vunpack.c.l.s4 1966171168
        %v1313 = vunpack.c.0.s8 %v1312
        %v1314 = vlaneseq
        %v1315 = vshrl.u32 %v1314, 7
        %v1316 = vsub.s32 %v1313, %v1315
        %v1317 = vrot.slane %v1301, %v1316
        %v1319 = vunpack.c.l.s4 1966171168
        %v1320 = vunpack.c.0.s8 %v1319
        %v1321 = vlaneseq
        %v1322 = vshrl.u32 %v1321, 7
        %v1323 = vsub.s32 %v1320, %v1322
        %v1324 = vrot.slane %v1302, %v1323
        %v1326 = vunpack.c.l.s4 1966171168
        %v1327 = vunpack.c.0.s8 %v1326
        %v1328 = vlaneseq
        %v1329 = vshrl.u32 %v1328, 7
        %v1330 = vsub.s32 %v1327, %v1329
        %v1331 = vrot.slane %v1303, %v1330
        %v1332 = vcombine.low %v1310, %v1317
        %v1333 = vcombine.low %v1324, %v1331
        %v1335 = vunpack.c.l.s4 1966171168
        %v1336 = vunpack.c.0.s8 %v1335
        %v1337 = vlaneseq
        %v1338 = vshrl.u32 %v1337, 7
        %v1339 = vsub.s32 %v1336, %v1338
        %v1340 = vrot.slane %v1332, %v1339
        %v1342 = vunpack.c.l.s4 1966171168
        %v1343 = vunpack.c.0.s8 %v1342
        %v1344 = vlaneseq
        %v1345 = vshrl.u32 %v1344, 7
        %v1346 = vsub.s32 %v1343, %v1345
        %v1347 = vrot.slane %v1333, %v1346
        %v1348 = vcombine.low %v1340, %v1347
        %v1349 = vcombine.low %v704, %v708
        %v1350 = vcombine.low %v712, %v716
        %v1351 = vcombine.low %v720, %v724
        %v1352 = vcombine.low %v728, %v732
        %v1354 = vunpack.c.l.s4 1966171168
        %v1355 = vunpack.c.0.s8 %v1354
        %v1356 = vlaneseq
        %v1357 = vshrl.u32 %v1356, 7
        %v1358 = vsub.s32 %v1355, %v1357
        %v1359 = vrot.slane %v1349, %v1358
        %v1361 = vunpack.c.l.s4 1966171168
        %v1362 = vunpack.c.0.s8 %v1361
        %v1363 = vlaneseq
        %v1364 = vshrl.u32 %v1363, 7
        %v1365 = vsub.s32 %v1362, %v1364
        %v1366 = vrot.slane %v1350, %v1365
        %v1368 = vunpack.c.l.s4 1966171168
        %v1369 = vunpack.c.0.s8 %v1368
        %v1370 = vlaneseq
        %v1371 = vshrl.u32 %v1370, 7
        %v1372 = vsub.s32 %v1369, %v1371
        %v1373 = vrot.slane %v1351, %v1372
        %v1375 = vunpack.c.l.s4 1966171168
        %v1376 = vunpack.c.0.s8 %v1375
        %v1377 = vlaneseq
        %v1378 = vshrl.u32 %v1377, 7
        %v1379 = vsub.s32 %v1376, %v1378
        %v1380 = vrot.slane %v1352, %v1379
        %v1381 = vcombine.low %v1359, %v1366
        %v1382 = vcombine.low %v1373, %v1380
        %v1384 = vunpack.c.l.s4 1966171168
        %v1385 = vunpack.c.0.s8 %v1384
        %v1386 = vlaneseq
        %v1387 = vshrl.u32 %v1386, 7
        %v1388 = vsub.s32 %v1385, %v1387
        %v1389 = vrot.slane %v1381, %v1388
        %v1391 = vunpack.c.l.s4 1966171168
        %v1392 = vunpack.c.0.s8 %v1391
        %v1393 = vlaneseq
        %v1394 = vshrl.u32 %v1393, 7
        %v1395 = vsub.s32 %v1392, %v1394
        %v1396 = vrot.slane %v1382, %v1395
        %v1397 = vcombine.low %v1389, %v1396
        %v1398 = vcombine.low %v736, %v740
        %v1399 = vcombine.low %v744, %v748
        %v1400 = vcombine.low %v752, %v756
        %v1401 = vcombine.low %v760, %v764
        %v1403 = vunpack.c.l.s4 1966171168
        %v1404 = vunpack.c.0.s8 %v1403
        %v1405 = vlaneseq
        %v1406 = vshrl.u32 %v1405, 7
        %v1407 = vsub.s32 %v1404, %v1406
        %v1408 = vrot.slane %v1398, %v1407
        %v1410 = vunpack.c.l.s4 1966171168
        %v1411 = vunpack.c.0.s8 %v1410
        %v1412 = vlaneseq
        %v1413 = vshrl.u32 %v1412, 7
        %v1414 = vsub.s32 %v1411, %v1413
        %v1415 = vrot.slane %v1399, %v1414
        %v1417 = vunpack.c.l.s4 1966171168
        %v1418 = vunpack.c.0.s8 %v1417
        %v1419 = vlaneseq
        %v1420 = vshrl.u32 %v1419, 7
        %v1421 = vsub.s32 %v1418, %v1420
        %v1422 = vrot.slane %v1400, %v1421
        %v1424 = vunpack.c.l.s4 1966171168
        %v1425 = vunpack.c.0.s8 %v1424
        %v1426 = vlaneseq
        %v1427 = vshrl.u32 %v1426, 7
        %v1428 = vsub.s32 %v1425, %v1427
        %v1429 = vrot.slane %v1401, %v1428
        %v1430 = vcombine.low %v1408, %v1415
        %v1431 = vcombine.low %v1422, %v1429
        %v1433 = vunpack.c.l.s4 1966171168
        %v1434 = vunpack.c.0.s8 %v1433
        %v1435 = vlaneseq
        %v1436 = vshrl.u32 %v1435, 7
        %v1437 = vsub.s32 %v1434, %v1436
        %v1438 = vrot.slane %v1430, %v1437
        %v1440 = vunpack.c.l.s4 1966171168
        %v1441 = vunpack.c.0.s8 %v1440
        %v1442 = vlaneseq
        %v1443 = vshrl.u32 %v1442, 7
        %v1444 = vsub.s32 %v1441, %v1443
        %v1445 = vrot.slane %v1431, %v1444
        %v1446 = vcombine.low %v1438, %v1445
        %v1447 = vcombine.low %v768, %v772
        %v1448 = vcombine.low %v776, %v780
        %v1449 = vcombine.low %v784, %v788
        %v1450 = vcombine.low %v792, %v796
        %v1452 = vunpack.c.l.s4 1966171168
        %v1453 = vunpack.c.0.s8 %v1452
        %v1454 = vlaneseq
        %v1455 = vshrl.u32 %v1454, 7
        %v1456 = vsub.s32 %v1453, %v1455
        %v1457 = vrot.slane %v1447, %v1456
        %v1459 = vunpack.c.l.s4 1966171168
        %v1460 = vunpack.c.0.s8 %v1459
        %v1461 = vlaneseq
        %v1462 = vshrl.u32 %v1461, 7
        %v1463 = vsub.s32 %v1460, %v1462
        %v1464 = vrot.slane %v1448, %v1463
        %v1466 = vunpack.c.l.s4 1966171168
        %v1467 = vunpack.c.0.s8 %v1466
        %v1468 = vlaneseq
        %v1469 = vshrl.u32 %v1468, 7
        %v1470 = vsub.s32 %v1467, %v1469
        %v1471 = vrot.slane %v1449, %v1470
        %v1473 = vunpack.c.l.s4 1966171168
        %v1474 = vunpack.c.0.s8 %v1473
        %v1475 = vlaneseq
        %v1476 = vshrl.u32 %v1475, 7
        %v1477 = vsub.s32 %v1474, %v1476
        %v1478 = vrot.slane %v1450, %v1477
        %v1479 = vcombine.low %v1457, %v1464
        %v1480 = vcombine.low %v1471, %v1478
        %v1482 = vunpack.c.l.s4 1966171168
        %v1483 = vunpack.c.0.s8 %v1482
        %v1484 = vlaneseq
        %v1485 = vshrl.u32 %v1484, 7
        %v1486 = vsub.s32 %v1483, %v1485
        %v1487 = vrot.slane %v1479, %v1486
        %v1489 = vunpack.c.l.s4 1966171168
        %v1490 = vunpack.c.0.s8 %v1489
        %v1491 = vlaneseq
        %v1492 = vshrl.u32 %v1491, 7
        %v1493 = vsub.s32 %v1490, %v1492
        %v1494 = vrot.slane %v1480, %v1493
        %v1495 = vcombine.low %v1487, %v1494
        %v1496 = vcombine.low %v800, %v804
        %v1497 = vcombine.low %v808, %v812
        %v1498 = vcombine.low %v816, %v820
        %v1499 = vcombine.low %v824, %v828
        %v1501 = vunpack.c.l.s4 1966171168
        %v1502 = vunpack.c.0.s8 %v1501
        %v1503 = vlaneseq
        %v1504 = vshrl.u32 %v1503, 7
        %v1505 = vsub.s32 %v1502, %v1504
        %v1506 = vrot.slane %v1496, %v1505
        %v1508 = vunpack.c.l.s4 1966171168
        %v1509 = vunpack.c.0.s8 %v1508
        %v1510 = vlaneseq
        %v1511 = vshrl.u32 %v1510, 7
        %v1512 = vsub.s32 %v1509, %v1511
        %v1513 = vrot.slane %v1497, %v1512
        %v1515 = vunpack.c.l.s4 1966171168
        %v1516 = vunpack.c.0.s8 %v1515
        %v1517 = vlaneseq
        %v1518 = vshrl.u32 %v1517, 7
        %v1519 = vsub.s32 %v1516, %v1518
        %v1520 = vrot.slane %v1498, %v1519
        %v1522 = vunpack.c.l.s4 1966171168
        %v1523 = vunpack.c.0.s8 %v1522
        %v1524 = vlaneseq
        %v1525 = vshrl.u32 %v1524, 7
        %v1526 = vsub.s32 %v1523, %v1525
        %v1527 = vrot.slane %v1499, %v1526
        %v1528 = vcombine.low %v1506, %v1513
        %v1529 = vcombine.low %v1520, %v1527
        %v1531 = vunpack.c.l.s4 1966171168
        %v1532 = vunpack.c.0.s8 %v1531
        %v1533 = vlaneseq
        %v1534 = vshrl.u32 %v1533, 7
        %v1535 = vsub.s32 %v1532, %v1534
        %v1536 = vrot.slane %v1528, %v1535
        %v1538 = vunpack.c.l.s4 1966171168
        %v1539 = vunpack.c.0.s8 %v1538
        %v1540 = vlaneseq
        %v1541 = vshrl.u32 %v1540, 7
        %v1542 = vsub.s32 %v1539, %v1541
        %v1543 = vrot.slane %v1529, %v1542
        %v1544 = vcombine.low %v1536, %v1543
        %v1545 = vcombine.low %v832, %v836
        %v1546 = vcombine.low %v840, %v844
        %v1547 = vcombine.low %v848, %v852
        %v1548 = vcombine.low %v856, %v860
        %v1550 = vunpack.c.l.s4 1966171168
        %v1551 = vunpack.c.0.s8 %v1550
        %v1552 = vlaneseq
        %v1553 = vshrl.u32 %v1552, 7
        %v1554 = vsub.s32 %v1551, %v1553
        %v1555 = vrot.slane %v1545, %v1554
        %v1557 = vunpack.c.l.s4 1966171168
        %v1558 = vunpack.c.0.s8 %v1557
        %v1559 = vlaneseq
        %v1560 = vshrl.u32 %v1559, 7
        %v1561 = vsub.s32 %v1558, %v1560
        %v1562 = vrot.slane %v1546, %v1561
        %v1564 = vunpack.c.l.s4 1966171168
        %v1565 = vunpack.c.0.s8 %v1564
        %v1566 = vlaneseq
        %v1567 = vshrl.u32 %v1566, 7
        %v1568 = vsub.s32 %v1565, %v1567
        %v1569 = vrot.slane %v1547, %v1568
        %v1571 = vunpack.c.l.s4 1966171168
        %v1572 = vunpack.c.0.s8 %v1571
        %v1573 = vlaneseq
        %v1574 = vshrl.u32 %v1573, 7
        %v1575 = vsub.s32 %v1572, %v1574
        %v1576 = vrot.slane %v1548, %v1575
        %v1577 = vcombine.low %v1555, %v1562
        %v1578 = vcombine.low %v1569, %v1576
        %v1580 = vunpack.c.l.s4 1966171168
        %v1581 = vunpack.c.0.s8 %v1580
        %v1582 = vlaneseq
        %v1583 = vshrl.u32 %v1582, 7
        %v1584 = vsub.s32 %v1581, %v1583
        %v1585 = vrot.slane %v1577, %v1584
        %v1587 = vunpack.c.l.s4 1966171168
        %v1588 = vunpack.c.0.s8 %v1587
        %v1589 = vlaneseq
        %v1590 = vshrl.u32 %v1589, 7
        %v1591 = vsub.s32 %v1588, %v1590
        %v1592 = vrot.slane %v1578, %v1591
        %v1593 = vcombine.low %v1585, %v1592
        %v1594 = vcombine.low %v864, %v868
        %v1595 = vcombine.low %v872, %v876
        %v1596 = vcombine.low %v880, %v884
        %v1597 = vcombine.low %v888, %v892
        %v1599 = vunpack.c.l.s4 1966171168
        %v1600 = vunpack.c.0.s8 %v1599
        %v1601 = vlaneseq
        %v1602 = vshrl.u32 %v1601, 7
        %v1603 = vsub.s32 %v1600, %v1602
        %v1604 = vrot.slane %v1594, %v1603
        %v1606 = vunpack.c.l.s4 1966171168
        %v1607 = vunpack.c.0.s8 %v1606
        %v1608 = vlaneseq
        %v1609 = vshrl.u32 %v1608, 7
        %v1610 = vsub.s32 %v1607, %v1609
        %v1611 = vrot.slane %v1595, %v1610
        %v1613 = vunpack.c.l.s4 1966171168
        %v1614 = vunpack.c.0.s8 %v1613
        %v1615 = vlaneseq
        %v1616 = vshrl.u32 %v1615, 7
        %v1617 = vsub.s32 %v1614, %v1616
        %v1618 = vrot.slane %v1596, %v1617
        %v1620 = vunpack.c.l.s4 1966171168
        %v1621 = vunpack.c.0.s8 %v1620
        %v1622 = vlaneseq
        %v1623 = vshrl.u32 %v1622, 7
        %v1624 = vsub.s32 %v1621, %v1623
        %v1625 = vrot.slane %v1597, %v1624
        %v1626 = vcombine.low %v1604, %v1611
        %v1627 = vcombine.low %v1618, %v1625
        %v1629 = vunpack.c.l.s4 1966171168
        %v1630 = vunpack.c.0.s8 %v1629
        %v1631 = vlaneseq
        %v1632 = vshrl.u32 %v1631, 7
        %v1633 = vsub.s32 %v1630, %v1632
        %v1634 = vrot.slane %v1626, %v1633
        %v1636 = vunpack.c.l.s4 1966171168
        %v1637 = vunpack.c.0.s8 %v1636
        %v1638 = vlaneseq
        %v1639 = vshrl.u32 %v1638, 7
        %v1640 = vsub.s32 %v1637, %v1639
        %v1641 = vrot.slane %v1627, %v1640
        %v1642 = vcombine.low %v1634, %v1641
        %v1643 = vcombine.low %v896, %v900
        %v1644 = vcombine.low %v904, %v908
        %v1645 = vcombine.low %v912, %v916
        %v1646 = vcombine.low %v920, %v924
        %v1648 = vunpack.c.l.s4 1966171168
        %v1649 = vunpack.c.0.s8 %v1648
        %v1650 = vlaneseq
        %v1651 = vshrl.u32 %v1650, 7
        %v1652 = vsub.s32 %v1649, %v1651
        %v1653 = vrot.slane %v1643, %v1652
        %v1655 = vunpack.c.l.s4 1966171168
        %v1656 = vunpack.c.0.s8 %v1655
        %v1657 = vlaneseq
        %v1658 = vshrl.u32 %v1657, 7
        %v1659 = vsub.s32 %v1656, %v1658
        %v1660 = vrot.slane %v1644, %v1659
        %v1662 = vunpack.c.l.s4 1966171168
        %v1663 = vunpack.c.0.s8 %v1662
        %v1664 = vlaneseq
        %v1665 = vshrl.u32 %v1664, 7
        %v1666 = vsub.s32 %v1663, %v1665
        %v1667 = vrot.slane %v1645, %v1666
        %v1669 = vunpack.c.l.s4 1966171168
        %v1670 = vunpack.c.0.s8 %v1669
        %v1671 = vlaneseq
        %v1672 = vshrl.u32 %v1671, 7
        %v1673 = vsub.s32 %v1670, %v1672
        %v1674 = vrot.slane %v1646, %v1673
        %v1675 = vcombine.low %v1653, %v1660
        %v1676 = vcombine.low %v1667, %v1674
        %v1678 = vunpack.c.l.s4 1966171168
        %v1679 = vunpack.c.0.s8 %v1678
        %v1680 = vlaneseq
        %v1681 = vshrl.u32 %v1680, 7
        %v1682 = vsub.s32 %v1679, %v1681
        %v1683 = vrot.slane %v1675, %v1682
        %v1685 = vunpack.c.l.s4 1966171168
        %v1686 = vunpack.c.0.s8 %v1685
        %v1687 = vlaneseq
        %v1688 = vshrl.u32 %v1687, 7
        %v1689 = vsub.s32 %v1686, %v1688
        %v1690 = vrot.slane %v1676, %v1689
        %v1691 = vcombine.low %v1683, %v1690
        %v1692 = vcombine.low %v928, %v932
        %v1693 = vcombine.low %v936, %v940
        %v1694 = vcombine.low %v944, %v948
        %v1695 = vcombine.low %v952, %v956
        %v1697 = vunpack.c.l.s4 1966171168
        %v1698 = vunpack.c.0.s8 %v1697
        %v1699 = vlaneseq
        %v1700 = vshrl.u32 %v1699, 7
        %v1701 = vsub.s32 %v1698, %v1700
        %v1702 = vrot.slane %v1692, %v1701
        %v1704 = vunpack.c.l.s4 1966171168
        %v1705 = vunpack.c.0.s8 %v1704
        %v1706 = vlaneseq
        %v1707 = vshrl.u32 %v1706, 7
        %v1708 = vsub.s32 %v1705, %v1707
        %v1709 = vrot.slane %v1693, %v1708
        %v1711 = vunpack.c.l.s4 1966171168
        %v1712 = vunpack.c.0.s8 %v1711
        %v1713 = vlaneseq
        %v1714 = vshrl.u32 %v1713, 7
        %v1715 = vsub.s32 %v1712, %v1714
        %v1716 = vrot.slane %v1694, %v1715
        %v1718 = vunpack.c.l.s4 1966171168
        %v1719 = vunpack.c.0.s8 %v1718
        %v1720 = vlaneseq
        %v1721 = vshrl.u32 %v1720, 7
        %v1722 = vsub.s32 %v1719, %v1721
        %v1723 = vrot.slane %v1695, %v1722
        %v1724 = vcombine.low %v1702, %v1709
        %v1725 = vcombine.low %v1716, %v1723
        %v1727 = vunpack.c.l.s4 1966171168
        %v1728 = vunpack.c.0.s8 %v1727
        %v1729 = vlaneseq
        %v1730 = vshrl.u32 %v1729, 7
        %v1731 = vsub.s32 %v1728, %v1730
        %v1732 = vrot.slane %v1724, %v1731
        %v1734 = vunpack.c.l.s4 1966171168
        %v1735 = vunpack.c.0.s8 %v1734
        %v1736 = vlaneseq
        %v1737 = vshrl.u32 %v1736, 7
        %v1738 = vsub.s32 %v1735, %v1737
        %v1739 = vrot.slane %v1725, %v1738
        %v1740 = vcombine.low %v1732, %v1739
        %1741 = vset.pattern.permute.xlu0 0
        %1742 = vperm.xlu0 %1741, %v1005
        %v1743 = vpop.permute.xlu0 %1742
        %1744 = vset.pattern.permute.xlu0 0
        %1745 = vperm.xlu0 %1744, %v1054
        %v1746 = vpop.permute.xlu0 %1745
        %1747 = vset.pattern.permute.xlu0 0
        %1748 = vperm.xlu0 %1747, %v1103
        %v1749 = vpop.permute.xlu0 %1748
        %1750 = vset.pattern.permute.xlu0 0
        %1751 = vperm.xlu0 %1750, %v1152
        %v1752 = vpop.permute.xlu0 %1751
        %1753 = vset.pattern.permute.xlu0 0
        %1754 = vperm.xlu0 %1753, %v1201
        %v1755 = vpop.permute.xlu0 %1754
        %1756 = vset.pattern.permute.xlu0 0
        %1757 = vperm.xlu0 %1756, %v1250
        %v1758 = vpop.permute.xlu0 %1757
        %1759 = vset.pattern.permute.xlu0 0
        %1760 = vperm.xlu0 %1759, %v1299
        %v1761 = vpop.permute.xlu0 %1760
        %1762 = vset.pattern.permute.xlu0 0
        %1763 = vperm.xlu0 %1762, %v1348
        %v1764 = vpop.permute.xlu0 %1763
        %1765 = vset.pattern.permute.xlu0 0
        %1766 = vperm.xlu0 %1765, %v1397
        %v1767 = vpop.permute.xlu0 %1766
        %1768 = vset.pattern.permute.xlu0 0
        %1769 = vperm.xlu0 %1768, %v1446
        %v1770 = vpop.permute.xlu0 %1769
        %1771 = vset.pattern.permute.xlu0 0
        %1772 = vperm.xlu0 %1771, %v1495
        %v1773 = vpop.permute.xlu0 %1772
        %1774 = vset.pattern.permute.xlu0 0
        %1775 = vperm.xlu0 %1774, %v1544
        %v1776 = vpop.permute.xlu0 %1775
        %1777 = vset.pattern.permute.xlu0 0
        %1778 = vperm.xlu0 %1777, %v1593
        %v1779 = vpop.permute.xlu0 %1778
        %1780 = vset.pattern.permute.xlu0 0
        %1781 = vperm.xlu0 %1780, %v1642
        %v1782 = vpop.permute.xlu0 %1781
        %1783 = vset.pattern.permute.xlu0 0
        %1784 = vperm.xlu0 %1783, %v1691
        %v1785 = vpop.permute.xlu0 %1784
        %1786 = vset.pattern.permute.xlu0 0
        %1787 = vperm.xlu0 %1786, %v1740
        %v1788 = vpop.permute.xlu0 %1787
        %v1789 = vlaneseq
        %v1790 = vand.u32 %v1789, 127
        %v1791 = vlaneseq
        %v1792 = vshrl.u32 %v1791, 7
        %v1793 = vsub.s32 %v1790, %v1792
        %v1794 = vrot.slane %v1743, %v1793
        %v1795 = vadd.s32 %v1790, 4294967288
        %v1796 = vlaneseq
        %v1797 = vshrl.u32 %v1796, 7
        %v1798 = vsub.s32 %v1795, %v1797
        %v1799 = vrot.slane %v1746, %v1798
        %vm1800 = vcmask 130112
        %v1801 = vsel %vm1800, %v1799, %v1794
        %v1802 = vadd.s32 %v1790, 4294967280
        %v1803 = vlaneseq
        %v1804 = vshrl.u32 %v1803, 7
        %v1805 = vsub.s32 %v1802, %v1804
        %v1806 = vrot.slane %v1749, %v1805
        %vm1807 = vcmask 195712
        %v1808 = vsel %vm1807, %v1806, %v1801
        %v1809 = vadd.s32 %v1790, 4294967272
        %v1810 = vlaneseq
        %v1811 = vshrl.u32 %v1810, 7
        %v1812 = vsub.s32 %v1809, %v1811
        %v1813 = vrot.slane %v1752, %v1812
        %vm1814 = vcmask 261312
        %v1815 = vsel %vm1814, %v1813, %v1808
        %v1816 = vadd.s32 %v1790, 4294967264
        %v1817 = vlaneseq
        %v1818 = vshrl.u32 %v1817, 7
        %v1819 = vsub.s32 %v1816, %v1818
        %v1820 = vrot.slane %v1755, %v1819
        %vm1821 = vcmask 326912
        %v1822 = vsel %vm1821, %v1820, %v1815
        %v1823 = vadd.s32 %v1790, 4294967256
        %v1824 = vlaneseq
        %v1825 = vshrl.u32 %v1824, 7
        %v1826 = vsub.s32 %v1823, %v1825
        %v1827 = vrot.slane %v1758, %v1826
        %vm1828 = vcmask 392512
        %v1829 = vsel %vm1828, %v1827, %v1822
        %v1830 = vadd.s32 %v1790, 4294967248
        %v1831 = vlaneseq
        %v1832 = vshrl.u32 %v1831, 7
        %v1833 = vsub.s32 %v1830, %v1832
        %v1834 = vrot.slane %v1761, %v1833
        %vm1835 = vcmask 458112
        %v1836 = vsel %vm1835, %v1834, %v1829
        %v1837 = vadd.s32 %v1790, 4294967240
        %v1838 = vlaneseq
        %v1839 = vshrl.u32 %v1838, 7
        %v1840 = vsub.s32 %v1837, %v1839
        %v1841 = vrot.slane %v1764, %v1840
        %vm1842 = vcmask 523712
        %v1843 = vsel %vm1842, %v1841, %v1836
        %v1844 = vadd.s32 %v1790, 4294967232
        %v1845 = vlaneseq
        %v1846 = vshrl.u32 %v1845, 7
        %v1847 = vsub.s32 %v1844, %v1846
        %v1848 = vrot.slane %v1767, %v1847
        %vm1849 = vcmask 589312
        %v1850 = vsel %vm1849, %v1848, %v1843
        %v1851 = vadd.s32 %v1790, 4294967224
        %v1852 = vlaneseq
        %v1853 = vshrl.u32 %v1852, 7
        %v1854 = vsub.s32 %v1851, %v1853
        %v1855 = vrot.slane %v1770, %v1854
        %vm1856 = vcmask 654912
        %v1857 = vsel %vm1856, %v1855, %v1850
        %v1858 = vadd.s32 %v1790, 4294967216
        %v1859 = vlaneseq
        %v1860 = vshrl.u32 %v1859, 7
        %v1861 = vsub.s32 %v1858, %v1860
        %v1862 = vrot.slane %v1773, %v1861
        %vm1863 = vcmask 720512
        %v1864 = vsel %vm1863, %v1862, %v1857
        %v1865 = vadd.s32 %v1790, 4294967208
        %v1866 = vlaneseq
        %v1867 = vshrl.u32 %v1866, 7
        %v1868 = vsub.s32 %v1865, %v1867
        %v1869 = vrot.slane %v1776, %v1868
        %vm1870 = vcmask 786112
        %v1871 = vsel %vm1870, %v1869, %v1864
        %v1872 = vadd.s32 %v1790, 4294967200
        %v1873 = vlaneseq
        %v1874 = vshrl.u32 %v1873, 7
        %v1875 = vsub.s32 %v1872, %v1874
        %v1876 = vrot.slane %v1779, %v1875
        %vm1877 = vcmask 851712
        %v1878 = vsel %vm1877, %v1876, %v1871
        %v1879 = vadd.s32 %v1790, 4294967192
        %v1880 = vlaneseq
        %v1881 = vshrl.u32 %v1880, 7
        %v1882 = vsub.s32 %v1879, %v1881
        %v1883 = vrot.slane %v1782, %v1882
        %vm1884 = vcmask 917312
        %v1885 = vsel %vm1884, %v1883, %v1878
        %v1886 = vadd.s32 %v1790, 4294967184
        %v1887 = vlaneseq
        %v1888 = vshrl.u32 %v1887, 7
        %v1889 = vsub.s32 %v1886, %v1888
        %v1890 = vrot.slane %v1785, %v1889
        %vm1891 = vcmask 982912
        %v1892 = vsel %vm1891, %v1890, %v1885
        %v1893 = vadd.s32 %v1790, 4294967176
        %v1894 = vlaneseq
        %v1895 = vshrl.u32 %v1894, 7
        %v1896 = vsub.s32 %v1893, %v1895
        %v1897 = vrot.slane %v1788, %v1896
        %vm1898 = vcmask 1048512
        %v1899 = vsel %vm1898, %v1897, %v1892
        %v1901 = vunpack.c.l.s4 1966171168
        %v1902 = vunpack.c.0.s8 %v1901
        %v1903 = vlaneseq
        %v1904 = vshrl.u32 %v1903, 7
        %v1905 = vsub.s32 %v1902, %v1904
        %v1906 = vrot.slane %v1899, %v1905
        %v1908 = vunpack.c.l.s4 1966171168
        %v1909 = vunpack.c.0.s8 %v1908
        %v1910 = vlaneseq
        %v1911 = vshrl.u32 %v1910, 7
        %v1912 = vsub.s32 %v1909, %v1911
        %v1913 = vrot.slane %v1906, %v1912
        %v1915 = vadd.f32 %v396, %v1913
        %1916 = vst [vmem:[#allocation6] sm:$0x1] %v1915
        %v1917 = vld [vmem:[#allocation2] sm:$0xff]
        %1918 = vmatprep.subr.mxu0 0.0
        %1919 = vmatpush1.xpose.msra.mxu0 %v371
        %1920 = vmatprep.subr.mxu0 0.0
        %1921 = vmatpush1.xpose.msra.mxu0 %v370
        %1922 = vmatprep.subr.mxu0 0.0
        %1923 = vmatpush1.xpose.msra.mxu0 %v369
        %1924 = vmatprep.subr.mxu0 0.0
        %1925 = vmatpush1.xpose.msra.mxu0 %v368
        %1926 = vmatprep.subr.mxu0 0.0
        %1927 = vmatpush1.xpose.msra.mxu0 %v367
        %1928 = vmatprep.subr.mxu0 0.0
        %1929 = vmatpush1.xpose.msra.mxu0 %v366
        %1930 = vmatprep.subr.mxu0 0.0
        %1931 = vmatpush1.xpose.msra.mxu0 %v365
        %1932 = vmatprep.subr.mxu0 0.0
        %1933 = vmatpush1.xpose.msra.mxu0 %v364
        %1934 = vmatprep.subr.mxu0 0.0
        %1935 = vmatpush1.xpose.msra.mxu0 %v363
        %1936 = vmatprep.subr.mxu0 0.0
        %1937 = vmatpush1.xpose.msra.mxu0 %v362
        %1938 = vmatprep.subr.mxu0 0.0
        %1939 = vmatpush1.xpose.msra.mxu0 %v361
        %1940 = vmatprep.subr.mxu0 0.0
        %1941 = vmatpush1.xpose.msra.mxu0 %v360
        %1942 = vmatprep.subr.mxu0 0.0
        %1943 = vmatpush1.xpose.msra.mxu0 %v359
        %1944 = vmatprep.subr.mxu0 0.0
        %1945 = vmatpush1.xpose.msra.mxu0 %v358
        %1946 = vmatprep.subr.mxu0 0.0
        %1947 = vmatpush1.xpose.msra.mxu0 %v357
        %1948 = vmatprep.subr.mxu0 0.0
        %1949 = vmatpush1.xpose.msra.mxu0 %v356
        %1950 = vmatprep.subr.mxu0 0.0
        %1951 = vmatpush2.xpose.msra.mxu0 0.0
        %1952 = vmatprep.subr.mxu0 0.0
        %1953 = vmatpush2.xpose.msra.mxu0 0.0
        %1954 = vmatprep.subr.mxu0 0.0
        %1955 = vmatpush2.xpose.msra.mxu0 0.0
        %1956 = vmatprep.subr.mxu0 0.0
        %1957 = vmatpush2.xpose.msra.mxu0 0.0
        %1958 = vmatprep.subr.mxu0 0.0
        %1959 = vmatpush2.xpose.msra.mxu0 0.0
        %1960 = vmatprep.subr.mxu0 0.0
        %1961 = vmatpush2.xpose.msra.mxu0 0.0
        %1962 = vmatprep.subr.mxu0 0.0
        %1963 = vmatpush2.xpose.msra.mxu0 0.0
        %1964 = vmatprep.subr.mxu0 0.0
        %1965 = vmatpush2.xpose.msra.mxu0 0.0
        %1966 = vmatprep.subr.mxu0 0.0
        %1967 = vmatpush2.xpose.msra.mxu0 0.0
        %1968 = vmatprep.subr.mxu0 0.0
        %1969 = vmatpush2.xpose.msra.mxu0 0.0
        %1970 = vmatprep.subr.mxu0 0.0
        %1971 = vmatpush2.xpose.msra.mxu0 0.0
        %1972 = vmatprep.subr.mxu0 0.0
        %1973 = vmatpush2.xpose.msra.mxu0 0.0
        %1974 = vmatprep.subr.mxu0 0.0
        %1975 = vmatpush2.xpose.msra.mxu0 0.0
        %1976 = vmatprep.subr.mxu0 0.0
        %1977 = vmatpush2.xpose.msra.mxu0 0.0
        %1978 = vmatprep.subr.mxu0 0.0
        %1979 = vmatpush2.xpose.msra.mxu0 0.0
        %1980 = vmatprep.subr.mxu0 0.0
        %1981 = vmatpush2.xpose.msra.mxu0 0.0
        %1982 = vmatprep.mubr.f32.mxu0 0.0
        %1983 = vmatmul.mubr.f32.gmra.mxu0 %v355
        %v1984 = vpop.f32.mrf.mxu0
        %v1985 = vadd.f32 0.0, %v1984
        %v1986 = vpop.f32.mrf.mxu0
        %1987 = vdwg.mxu0
        %v1988 = vadd.f32 %v1917, %v1985
        %1989 = vst [vmem:[#allocation2] sm:$0xff] %v1988
        %v1990 = vld [vmem:[#allocation3] sm:$0xff]
        %1991 = vmatprep.subr.mxu0 0.0
        %1992 = vmatpush1.xpose.msra.mxu0 %v371
        %1993 = vmatprep.subr.mxu0 0.0
        %1994 = vmatpush1.xpose.msra.mxu0 %v370
        %1995 = vmatprep.subr.mxu0 0.0
        %1996 = vmatpush1.xpose.msra.mxu0 %v369
        %1997 = vmatprep.subr.mxu0 0.0
        %1998 = vmatpush1.xpose.msra.mxu0 %v368
        %1999 = vmatprep.subr.mxu0 0.0
        %2000 = vmatpush1.xpose.msra.mxu0 %v367
        %2001 = vmatprep.subr.mxu0 0.0
        %2002 = vmatpush1.xpose.msra.mxu0 %v366
        %2003 = vmatprep.subr.mxu0 0.0
        %2004 = vmatpush1.xpose.msra.mxu0 %v365
        %2005 = vmatprep.subr.mxu0 0.0
        %2006 = vmatpush1.xpose.msra.mxu0 %v364
        %2007 = vmatprep.subr.mxu0 0.0
        %2008 = vmatpush1.xpose.msra.mxu0 %v363
        %2009 = vmatprep.subr.mxu0 0.0
        %2010 = vmatpush1.xpose.msra.mxu0 %v362
        %2011 = vmatprep.subr.mxu0 0.0
        %2012 = vmatpush1.xpose.msra.mxu0 %v361
        %2013 = vmatprep.subr.mxu0 0.0
        %2014 = vmatpush1.xpose.msra.mxu0 %v360
        %2015 = vmatprep.subr.mxu0 0.0
        %2016 = vmatpush1.xpose.msra.mxu0 %v359
        %2017 = vmatprep.subr.mxu0 0.0
        %2018 = vmatpush1.xpose.msra.mxu0 %v358
        %2019 = vmatprep.subr.mxu0 0.0
        %2020 = vmatpush1.xpose.msra.mxu0 %v357
        %2021 = vmatprep.subr.mxu0 0.0
        %2022 = vmatpush1.xpose.msra.mxu0 %v356
        %2023 = vmatprep.subr.mxu0 0.0
        %2024 = vmatpush2.xpose.msra.mxu0 0.0
        %2025 = vmatprep.subr.mxu0 0.0
        %2026 = vmatpush2.xpose.msra.mxu0 0.0
        %2027 = vmatprep.subr.mxu0 0.0
        %2028 = vmatpush2.xpose.msra.mxu0 0.0
        %2029 = vmatprep.subr.mxu0 0.0
        %2030 = vmatpush2.xpose.msra.mxu0 0.0
        %2031 = vmatprep.subr.mxu0 0.0
        %2032 = vmatpush2.xpose.msra.mxu0 0.0
        %2033 = vmatprep.subr.mxu0 0.0
        %2034 = vmatpush2.xpose.msra.mxu0 0.0
        %2035 = vmatprep.subr.mxu0 0.0
        %2036 = vmatpush2.xpose.msra.mxu0 0.0
        %2037 = vmatprep.subr.mxu0 0.0
        %2038 = vmatpush2.xpose.msra.mxu0 0.0
        %2039 = vmatprep.subr.mxu0 0.0
        %2040 = vmatpush2.xpose.msra.mxu0 0.0
        %2041 = vmatprep.subr.mxu0 0.0
        %2042 = vmatpush2.xpose.msra.mxu0 0.0
        %2043 = vmatprep.subr.mxu0 0.0
        %2044 = vmatpush2.xpose.msra.mxu0 0.0
        %2045 = vmatprep.subr.mxu0 0.0
        %2046 = vmatpush2.xpose.msra.mxu0 0.0
        %2047 = vmatprep.subr.mxu0 0.0
        %2048 = vmatpush2.xpose.msra.mxu0 0.0
        %2049 = vmatprep.subr.mxu0 0.0
        %2050 = vmatpush2.xpose.msra.mxu0 0.0
        %2051 = vmatprep.subr.mxu0 0.0
        %2052 = vmatpush2.xpose.msra.mxu0 0.0
        %2053 = vmatprep.subr.mxu0 0.0
        %2054 = vmatpush2.xpose.msra.mxu0 0.0
        %2055 = vmatprep.mubr.f32.mxu0 0.0
        %2056 = vmatmul.mubr.f32.gmra.mxu0 %v375
        %v2057 = vpop.f32.mrf.mxu0
        %v2058 = vadd.f32 0.0, %v2057
        %v2059 = vpop.f32.mrf.mxu0
        %2060 = vdwg.mxu0
        %v2061 = vadd.f32 %v1990, %v2058
        %2062 = vst [vmem:[#allocation3] sm:$0xff] %v2061
        // Predicated region
        $region57: #{tpu_custom_call.1} parent=35 // pred_check
          %p2063 = pneg %p345
        $region58: #{tpu_custom_call.1} parent=35 // pred_check_branch
          %2065 = sbr.rel (%p2063) target = $region60
        $region59: #{tpu_custom_call.1} parent=35 // pred_region
          %v2066 = vld [vmem:[%s278] sm:$0xff]
          %v2067 = vld [vmem:[%s287] sm:$0xff]
          %v2068 = vld [vmem:[%s287 + $0x8] sm:$0xff]
          %vm2069 = vcmask 130048
          %v2070 = vsel %vm2069, %v2066, -inf
          %2071 = vmax.xlane.f32.xlu0 %v2070
          %v2072 = vpop.xlane.xlu0 %2071
          %v2073 = vsub.f32 %v2066, %v2072
          %v2074 = vmul.f32 %v2073, 1.442695
          %v2075 = vpow.pop %v2074
          %v2076 = vsel %vm2069, %v2075, 0.0
          %2077 = vadd.xlane.f32.xlu0 %v2076
          %v2078 = vpop.xlane.xlu0 %2077
          %v2080 = vsel %vm2069, %v2075, 0
          %2082 = vmatprep.subr.mxu0 0.0
          %2083 = vmatpush1.msra.mxu0 0.0
          %2084 = vmatprep.subr.mxu0 0.0
          %2085 = vmatpush1.msra.mxu0 0.0
          %2086 = vmatprep.subr.mxu0 0.0
          %2087 = vmatpush1.msra.mxu0 0.0
          %2088 = vmatprep.subr.mxu0 0.0
          %2089 = vmatpush1.msra.mxu0 0.0
          %2090 = vmatprep.subr.mxu0 0.0
          %2091 = vmatpush1.msra.mxu0 0.0
          %2092 = vmatprep.subr.mxu0 0.0
          %2093 = vmatpush1.msra.mxu0 0.0
          %2094 = vmatprep.subr.mxu0 0.0
          %2095 = vmatpush1.msra.mxu0 0.0
          %2096 = vmatprep.subr.mxu0 0.0
          %2097 = vmatpush1.msra.mxu0 0.0
          %2098 = vmatprep.subr.mxu0 0.0
          %2099 = vmatpush1.msra.mxu0 0.0
          %2100 = vmatprep.subr.mxu0 0.0
          %2101 = vmatpush1.msra.mxu0 0.0
          %2102 = vmatprep.subr.mxu0 0.0
          %2103 = vmatpush1.msra.mxu0 0.0
          %2104 = vmatprep.subr.mxu0 0.0
          %2105 = vmatpush1.msra.mxu0 0.0
          %2106 = vmatprep.subr.mxu0 0.0
          %2107 = vmatpush1.msra.mxu0 0.0
          %2108 = vmatprep.subr.mxu0 0.0
          %2109 = vmatpush1.msra.mxu0 0.0
          %2110 = vmatprep.subr.mxu0 0.0
          %2111 = vmatpush1.msra.mxu0 %v2068
          %2112 = vmatprep.subr.mxu0 0.0
          %2113 = vmatpush1.msra.mxu0 %v2067
          %2114 = vmatprep.subr.mxu0 0.0
          %2115 = vmatpush2.msra.mxu0 0.0
          %2116 = vmatprep.subr.mxu0 0.0
          %2117 = vmatpush2.msra.mxu0 0.0
          %2118 = vmatprep.subr.mxu0 0.0
          %2119 = vmatpush2.msra.mxu0 0.0
          %2120 = vmatprep.subr.mxu0 0.0
          %2121 = vmatpush2.msra.mxu0 0.0
          %2122 = vmatprep.subr.mxu0 0.0
          %2123 = vmatpush2.msra.mxu0 0.0
          %2124 = vmatprep.subr.mxu0 0.0
          %2125 = vmatpush2.msra.mxu0 0.0
          %2126 = vmatprep.subr.mxu0 0.0
          %2127 = vmatpush2.msra.mxu0 0.0
          %2128 = vmatprep.subr.mxu0 0.0
          %2129 = vmatpush2.msra.mxu0 0.0
          %2130 = vmatprep.subr.mxu0 0.0
          %2131 = vmatpush2.msra.mxu0 0.0
          %2132 = vmatprep.subr.mxu0 0.0
          %2133 = vmatpush2.msra.mxu0 0.0
          %2134 = vmatprep.subr.mxu0 0.0
          %2135 = vmatpush2.msra.mxu0 0.0
          %2136 = vmatprep.subr.mxu0 0.0
          %2137 = vmatpush2.msra.mxu0 0.0
          %2138 = vmatprep.subr.mxu0 0.0
          %2139 = vmatpush2.msra.mxu0 0.0
          %2140 = vmatprep.subr.mxu0 0.0
          %2141 = vmatpush2.msra.mxu0 0.0
          %2142 = vmatprep.subr.mxu0 0.0
          %2143 = vmatpush2.msra.mxu0 0.0
          %2144 = vmatprep.subr.mxu0 0.0
          %2145 = vmatpush2.msra.mxu0 0.0
          %2146 = vmatprep.mubr.f32.mxu0 0.0
          %2147 = vmatmul.mubr.f32.gmra.mxu0 %v2080
          %v2148 = vpop.f32.mrf.mxu0
          %v2149 = vadd.f32 0.0, %v2148
          %v2150 = vpop.f32.mrf.mxu0
          %2151 = vdwg.mxu0
          %v2152 = vrcp.pop %v2078
          %v2153 = vmul.f32 %v2149, %v2152
          %v2154 = vsub.f32 0.0, %v2153
          %v2155 = vld [vmem:[#allocation4] sm:$0xff]
          %v2156 = vld [vmem:[#allocation2] sm:$0xff]
          %2158 = vset.pattern.permute.xlu0 0
          %2159 = vperm.xlu0 %2158, %v2155
          %v2160 = vpop.permute.xlu0 %2159
          %v2162 = vsub.f32 %v2160, %v2156
          %v2163 = vmul.f32 %v2162, 0.0078125
          %v2164 = vld [vmem:[#allocation3] sm:$0xff]
          %v2165 = vmul.f32 %v2164, 2.0
          %v2166 = vadd.f32 %v2165, 1.0
          %v2167 = vld [vmem:[#allocation5] sm:$0xff]
          %v2168 = vld [vmem:[#allocation6] sm:$0x1]
          %2170 = vset.pattern.permute.xlu0 0
          %2171 = vperm.xlu0 %2170, %v2167
          %v2172 = vpop.permute.xlu0 %2171
          %v2175 = vlaneseq
          %v2176 = vshrl.u32 %v2175, 7
          %v2177 = vsub.s32 0, %v2176
          %v2178 = vrot.slane %v2168, %v2177
          %v2180 = vadd.f32 %v2172, %v2178
          %v2181 = vadd.f32 %v2180, 1.0
          %v2182 = vrcp.pop %v2181
          %v2183 = vmul.f32 %v2166, %v2182
          %v2184 = vsub.f32 1.0, %v2183
          %v2185 = vadd.f32 %v2163, %v2154
          %v2186 = vadd.f32 %v2185, %v2184
          %2187 = vst [vmem:[%s344] sm:$0xff] %v2186
        $region60: #{tpu_custom_call.1} parent=35 // pred_fallthru
          _
        %s2188 = sand.u32 %s155, 1
        %s2189 = scalar_lea.sflag [#allocation9], %s2188
        %s2190 = sand.u32 %s155, 1
        %s2191 = smul.addr %s2190, 8
        %s2192 = scalar_lea.vmem [#allocation15], %s2191
        // Predicated region
        $region61: #{tpu_custom_call.1} parent=35 // pred_check
          %p2193 = pneg %p165
        $region62: #{tpu_custom_call.1} parent=35 // pred_check_branch
          %2195 = sbr.rel (%p2193) target = $region64
        $region63: #{tpu_custom_call.1} parent=35 // pred_region
          %s2197 = ssub.s32 128, 128
          %2198 = vsyncadd %s2189, %s2197
          %s2199 = smul.addr %s31, 128
          %s2200 = scalar_lea.hbm %s4, %s2199
          %s2202 = sshll.u32 %s2192, 4
          %s2203 = int_to_ptr.vmem [resolvable:$true] %s2202
          %2205 = dma.vmem_to_hbm [thread:$0]  %s2203, 128, %s2200, %s2189
        $region64: #{tpu_custom_call.1} parent=35 // pred_fallthru
          _
      $region36: #{tpu_custom_call.1} parent=5 // pred_fallthru
        _
      %p2206 = scmp.le.s32.totalorder 2, %s22
      // Predicated region
      $region65: #{tpu_custom_call.1} parent=5 // pred_check
        %p2207 = pneg %p2206
      $region66: #{tpu_custom_call.1} parent=5 // pred_check_branch
        %2209 = sbr.rel (%p2207) target = $region68
      $region67: #{tpu_custom_call.1} parent=5 // pred_region
        %s2210 = ssub.s32 %s22, 2
        // Predicated region
        $region69: #{tpu_custom_call.1} parent=67 // pred_check
          %p2211 = pneg %p171
        $region70: #{tpu_custom_call.1} parent=67 // pred_check_branch
          %2213 = sbr.rel (%p2211) target = $region72
        $region71: #{tpu_custom_call.1} parent=67 // pred_region
          %s2214 = sand.u32 %s156, 1
          %s2215 = scalar_lea.sflag [#allocation9], %s2214
          %s2216 = sand.u32 %s156, 1
          %s2217 = smul.addr %s2216, 8
          %s2218 = scalar_lea.vmem [#allocation15], %s2217
          %2219 = dma.done %s2215, 128
        $region72: #{tpu_custom_call.1} parent=67 // pred_fallthru
          _
      $region68: #{tpu_custom_call.1} parent=5 // pred_fallthru
        _
    $region6: #{tpu_custom_call.1} parent=1 // loop_footer
      %s26 = sadd.s32 1, %s22
    $region7: #{tpu_custom_call.1} parent=1 // loop_footer_branch
      %21 = sbr.rel target = $region3
    $region8: #{tpu_custom_call.1} parent=1 // loop_exit
      _
    %2220 = vsyncpa [#allocation8], 1
    %s2221 = scalar_lea.sflag [#allocation8], 1
    %2222 = vsyncpa %s2221, 1
    %2223 = vsyncpa [#allocation11], 1
    %s2224 = scalar_lea.sflag [#allocation11], 1
    %2225 = vsyncpa %s2224, 1
    %2226 = vsyncpa [#allocation14], 1
    %s2227 = scalar_lea.sflag [#allocation14], 1
    %2228 = vsyncpa %s2227, 1
    %2229 = vsyncpa [#allocation9], 1
    %s2230 = scalar_lea.sflag [#allocation9], 1
    %2231 = vsyncpa %s2230, 1

</llo_original>
